<compile_context>
chip_gen: v7x
topology: tpu7x:2x2x1
jax: 0.10.0
libtpu: 0.0.40
codegen_flags: <defaults>
</compile_context>

<pallas_src>
import functools
import math

import jax
import jax.numpy as jnp
from jax.experimental import pallas as pl
from jax.experimental.pallas import tpu as pltpu

_PAD_NEG = -3.0e38  # finite "-inf" for max-pool padding (keeps matmuls NaN-free)

INCEPTION_CFG = {  # (c_in, o1, r3, o3, r5, o5, opool)
    "3a": (192, 64, 96, 128, 16, 32, 32),
    "3b": (256, 128, 128, 192, 32, 96, 64),
    "4a": (480, 192, 96, 208, 16, 48, 64),
    "4b": (512, 160, 112, 224, 24, 64, 64),
    "4c": (512, 128, 128, 256, 24, 64, 64),
    "4d": (512, 112, 144, 288, 32, 64, 64),
    "4e": (528, 256, 160, 320, 32, 128, 128),
    "5a": (832, 256, 160, 320, 32, 128, 128),
    "5b": (832, 384, 192, 384, 48, 128, 128),
}


def _round_up(x, m):
    return ((x + m - 1) // m) * m


def _pick_tm(m_total):
    # Keep >= 2 row-blocks whenever possible so the 'parallel' grid axis can
    # feed both TensorCores on v7x even at the 14x14 / 7x7 stages.
    if m_total >= 256:
        return 128
    if m_total >= 16:
        return _round_up(-(-m_total // 2), 8)
    return _round_up(max(m_total, 1), 8)


def _splits(name):
    c = INCEPTION_CFG[name]
    return (c[1], c[2], c[4])  # (o1, r3, r5)


# ----------------------------------------------------------------------------
# Kernel 1: tiled GEMM  C = relu?(A @ B + bias), bf16 in / f32 acc / bf16 out.
# K is a full-extent block (no explicit K padding).  Used for conv1 (im2col).
# ----------------------------------------------------------------------------
def _matmul_kernel(a_ref, b_ref, bias_ref, o_ref, *, apply_relu):
    out = jnp.dot(a_ref[...], b_ref[...], preferred_element_type=jnp.float32)
    out = out + bias_ref[...]
    if apply_relu:
        out = jnp.maximum(out, 0.0)
    o_ref[...] = out.astype(o_ref.dtype)


def matmul_bias(a, b, bias, *, relu=False):
    """a:(M,K) float, b:(K,Np) bf16 with Np%128==0, bias:(Np,) -> (M,Np) bf16."""
    M, K = a.shape
    Kb, Np = b.shape
    assert Kb == K and Np % 128 == 0
    tm = 256 if M >= 256 else _round_up(M, 8)
    tn = 128
    Mp = _round_up(M, tm)
    a_p = a.astype(jnp.bfloat16)
    if Mp != M:
        a_p = jnp.pad(a_p, ((0, Mp - M), (0, 0)))
    out = pl.pallas_call(
        functools.partial(_matmul_kernel, apply_relu=relu),
        out_shape=jax.ShapeDtypeStruct((Mp, Np), jnp.bfloat16),
        grid_spec=pltpu.PrefetchScalarGridSpec(
            num_scalar_prefetch=0,
            grid=(Mp // tm, Np // tn),
            in_specs=[
                pl.BlockSpec((tm, K), lambda i, j: (i, 0)),
                pl.BlockSpec((K, tn), lambda i, j: (0, j)),
                pl.BlockSpec((1, tn), lambda i, j: (0, j)),
            ],
            out_specs=pl.BlockSpec((tm, tn), lambda i, j: (i, j)),
        ),
        compiler_params=pltpu.CompilerParams(
            dimension_semantics=("parallel", "parallel")),
    )(a_p, b.astype(jnp.bfloat16), bias.astype(jnp.float32).reshape(1, Np))
    return out[:M]


# ----------------------------------------------------------------------------
# Kernel 2: stride-1 convolution via resident shifted-window GEMMs.
# Padded bf16 activation flattened to (rows, C) and kept fully resident in
# VMEM.  One aligned window load per kh tap row; the kw shift is applied to
# the f32 MXU output (static slice), so bf16 operand loads stay 8-aligned.
# ----------------------------------------------------------------------------
def _shift_conv_kernel(a_ref, w_ref, b_ref, o_ref, *, row_offsets, kw_count,
                       tm, wext, apply_relu):
    i = pl.program_id(0)
    row0 = pl.multiple_of(i * tm, 8)
    acc = jnp.zeros(o_ref.shape, jnp.float32)          # (tm, 128) -> 16 vregs
    kk = 0
    for roff in row_offsets:                            # static unroll over kh
        win = a_ref[pl.ds(row0 + roff, tm + wext), :]   # aligned bf16 load
        for kw in range(kw_count):                      # static unroll over kw
            p = jnp.dot(win, w_ref[kk], preferred_element_type=jnp.float32)
            acc += p[kw:kw + tm] if wext else p         # shift the f32 result
            kk += 1
    out = acc + b_ref[...]
    if apply_relu:
        out = jnp.maximum(out, 0.0)
    o_ref[...] = out.astype(o_ref.dtype)


def pack_conv_s1(w, b):
    """PyTorch (O, C, KH, KW) conv -> ((KH*KW, C, Npad) bf16, (O,) f32 bias)."""
    O, C, KH, KW = w.shape
    Np = _round_up(O, 128)
    wr = jnp.transpose(w, (2, 3, 1, 0)).reshape(KH * KW, C, O)
    wr = jnp.pad(wr, ((0, 0), (0, 0), (0, Np - O))).astype(jnp.bfloat16)
    return (wr, b.astype(jnp.float32))


def conv2d_s1(x, packed, *, ksize, padding, relu=False):
    wr, b = packed                                   # (KK, C, Np) bf16, (O,) f32
    N, H, W, C = x.shape
    KK, Cw, Np = wr.shape
    assert Cw == C
    KH = KW = ksize
    assert KH * KW == KK
    O = b.shape[0]
    OH = H + 2 * padding - KH + 1
    OW = W + 2 * padding - KW + 1
    Hp = H + 2 * padding
    Wp8 = _round_up(W + 2 * padding, 8)
    xp = jnp.pad(x.astype(jnp.bfloat16),
                 ((0, 0), (padding, padding),
                  (padding, Wp8 - W - padding), (0, 0)))
    M_total = N * Hp * Wp8
    tm = _pick_tm(M_total)
    num_m = -(-M_total // tm)
    wext = 8 if KW > 1 else 0
    RA = _round_up(num_m * tm + (KH - 1) * Wp8 + wext, 8)
    A = jnp.pad(xp.reshape(M_total, C), ((0, RA - M_total), (0, 0)))
    tn = 128                                         # 16-vreg f32 accumulator
    num_n = Np // tn
    bias = jnp.pad(b, (0, Np - O)).reshape(1, Np)
    row_offsets = tuple(kh * Wp8 for kh in range(KH))
    out = pl.pallas_call(
        functools.partial(_shift_conv_kernel, row_offsets=row_offsets,
                          kw_count=KW, tm=tm, wext=wext, apply_relu=relu),
        out_shape=jax.ShapeDtypeStruct((num_m * tm, Np), jnp.bfloat16),
        grid_spec=pltpu.PrefetchScalarGridSpec(
            num_scalar_prefetch=0,
            grid=(num_m, num_n),
            in_specs=[
                pl.BlockSpec((RA, C), lambda i, j: (0, 0)),        # resident
                pl.BlockSpec((KK, C, tn), lambda i, j: (0, 0, j)),
                pl.BlockSpec((1, tn), lambda i, j: (0, j)),
            ],
            out_specs=pl.BlockSpec((tm, tn), lambda i, j: (i, j)),
        ),
        compiler_params=pltpu.CompilerParams(
            dimension_semantics=("parallel", "parallel")),
    )(A, wr, bias)
    # garbage rows (W alignment / trailing pad) are dropped by this crop
    return out[:M_total, :O].reshape(N, Hp, Wp8, O)[:, :OH, :OW, :]


# ----------------------------------------------------------------------------
# Kernel 3: stride-1 max pooling (inception branch4) - same resident layout.
# ----------------------------------------------------------------------------
def _shift_maxpool_kernel(a_ref, o_ref, *, row_offsets, kw_count, tm, wext):
    i = pl.program_id(0)
    row0 = pl.multiple_of(i * tm, 8)
    res = None
    for roff in row_offsets:
        win = a_ref[pl.ds(row0 + roff, tm + wext), :].astype(jnp.float32)
        for kw in range(kw_count):
            tap = win[kw:kw + tm] if wext else win
            res = tap if res is None else jnp.maximum(res, tap)
    o_ref[...] = res.astype(o_ref.dtype)


def maxpool2d_s1(x, ksize, padding):
    N, H, W, C = x.shape
    KH = KW = ksize
    OH = H + 2 * padding - KH + 1
    OW = W + 2 * padding - KW + 1
    Hp = H + 2 * padding
    Wp8 = _round_up(W + 2 * padding, 8)
    xp = jnp.pad(x.astype(jnp.bfloat16),
                 ((0, 0), (padding, padding),
                  (padding, Wp8 - W - padding), (0, 0)),
                 constant_values=_PAD_NEG)
    M_total = N * Hp * Wp8
    tm = _pick_tm(M_total)
    num_m = -(-M_total // tm)
    wext = 8 if KW > 1 else 0
    RA = _round_up(num_m * tm + (KH - 1) * Wp8 + wext, 8)
    A = jnp.pad(xp.reshape(M_total, C), ((0, RA - M_total), (0, 0)),
                constant_values=_PAD_NEG)
    row_offsets = tuple(kh * Wp8 for kh in range(KH))
    out = pl.pallas_call(
        functools.partial(_shift_maxpool_kernel, row_offsets=row_offsets,
                          kw_count=KW, tm=tm, wext=wext),
        out_shape=jax.ShapeDtypeStruct((num_m * tm, C), jnp.bfloat16),
        grid_spec=pltpu.PrefetchScalarGridSpec(
            num_scalar_prefetch=0,
            grid=(num_m,),
            in_specs=[pl.BlockSpec((RA, C), lambda i: (0, 0))],
            out_specs=pl.BlockSpec((tm, C), lambda i: (i, 0)),
        ),
        compiler_params=pltpu.CompilerParams(
            dimension_semantics=("parallel",)),
    )(A)
    return out[:M_total].reshape(N, Hp, Wp8, C)[:, :OH, :OW, :]


# ----------------------------------------------------------------------------
# Kernel 4: stride-2 max pooling computed fully in-kernel: aligned row loads,
# column-window max, then an exact 0/1 selection matmul does the stride-2
# column subsample (no full-resolution map is ever written to HBM).
# ----------------------------------------------------------------------------
def _strided_maxpool_kernel(a_ref, s_ref, o_ref, *, ksize, stride, Wp, OWp, ohb):
    j = pl.program_id(1)
    sel = s_ref[...]                                  # (OWp, Wp-(k-1)) bf16 0/1
    cm_w = Wp - (ksize - 1)
    for r in range(ohb):                              # static unroll
        base = pl.multiple_of((j * ohb + r) * stride * Wp, 8)
        rowmax = None
        for dh in range(ksize):                       # aligned bf16 row loads
            row = a_ref[0, pl.ds(base + dh * Wp, Wp), :].astype(jnp.float32)
            rowmax = row if rowmax is None else jnp.maximum(rowmax, row)
        colmax = rowmax[0:cm_w]
        for dw in range(1, ksize):
            colmax = jnp.maximum(colmax, rowmax[dw:cm_w + dw])
        # exact: each output row of `sel` has a single 1 -> picks colmax[stride*ow]
        out = jnp.dot(sel, colmax.astype(jnp.bfloat16),
                      preferred_element_type=jnp.float32)
        o_ref[0, r * OWp:(r + 1) * OWp, :] = out.astype(o_ref.dtype)


def maxpool2d_s2(x, ksize, stride, padding):
    N, H, W, C = x.shape
    OH = (H + 2 * padding - ksize) // stride + 1      # floor mode (PyTorch)
    OW = (W + 2 * padding - ksize) // stride + 1
    Hp = H + 2 * padding
    Wp = _round_up(W + 2 * padding, 8)
    OWp = _round_up(OW, 8)
    ohb = min(OH, max(1, 512 // OWp))
    num_j = -(-OH // ohb)
    max_oh = num_j * ohb - 1
    RA = _round_up(max((stride * max_oh + ksize) * Wp, Hp * Wp), 8)
    xp = jnp.pad(x.astype(jnp.bfloat16),
                 ((0, 0), (padding, padding),
                  (padding, Wp - W - padding), (0, 0)),
                 constant_values=_PAD_NEG)
    A = xp.reshape(N, Hp * Wp, C)
    A = jnp.pad(A, ((0, 0), (0, RA - Hp * Wp), (0, 0)),
                constant_values=_PAD_NEG)
    sel = (jnp.arange(Wp - ksize + 1)[None, :]
           == stride * jnp.arange(OWp)[:, None]).astype(jnp.bfloat16)
    out = pl.pallas_call(
        functools.partial(_strided_maxpool_kernel, ksize=ksize, stride=stride,
                          Wp=Wp, OWp=OWp, ohb=ohb),
        out_shape=jax.ShapeDtypeStruct((N, num_j * ohb * OWp, C), jnp.bfloat16),
        grid_spec=pltpu.PrefetchScalarGridSpec(
            num_scalar_prefetch=0,
            grid=(N, num_j),
            in_specs=[
                pl.BlockSpec((1, RA, C), lambda n, j: (n, 0, 0)),   # resident/img
                pl.BlockSpec((OWp, Wp - ksize + 1), lambda n, j: (0, 0)),
            ],
            out_specs=pl.BlockSpec((1, ohb * OWp, C), lambda n, j: (n, j, 0)),
        ),
        compiler_params=pltpu.CompilerParams(
            dimension_semantics=("parallel", "parallel")),
    )(A, sel)
    return out.reshape(N, num_j * ohb, OWp, C)[:, :OH, :OW, :]


# ----------------------------------------------------------------------------
# conv1 (7x7 stride 2, C_in=3): im2col + the tiled GEMM kernel (K unpadded).
# ----------------------------------------------------------------------------
def pack_conv_gemm(w, b):
    O, C, KH, KW = w.shape
    Np = _round_up(O, 128)
    wm = jnp.transpose(w, (2, 3, 1, 0)).reshape(KH * KW * C, O)
    wm = jnp.pad(wm, ((0, 0), (0, Np - O))).astype(jnp.bfloat16)
    return (wm, b.astype(jnp.float32))


def conv2d_im2col(x, packed, *, ksize, stride, padding, relu=False):
    # TODO(synk): the im2col stack itself is XLA glue; with C_in=3 a shifted-
    # window kernel would starve the MXU (K=3 per tap), so it stays for now.
    wm, b = packed
    O = b.shape[0]
    Np = wm.shape[1]
    N, H, W, C = x.shape
    KH = KW = ksize
    OH = (H + 2 * padding - KH) // stride + 1
    OW = (W + 2 * padding - KW) // stride + 1
    xp = jnp.pad(x, ((0, 0), (padding, padding), (padding, padding), (0, 0))
                 ).astype(jnp.bfloat16)
    cols = []
    for kh in range(KH):
        for kw in range(KW):
            cols.append(xp[:, kh:kh + stride * OH:stride,
                           kw:kw + stride * OW:stride, :])
    a = jnp.stack(cols, axis=3).reshape(N * OH * OW, KH * KW * C)
    bias = jnp.pad(b, (0, Np - O))
    out = matmul_bias(a, wm, bias, relu=relu)
    return out[:, :O].reshape(N, OH, OW, O)


# ----------------------------------------------------------------------------
# inception block: fused 1x1 branches (one GEMM), 3x3, 5x5, maxpool + 1x1
# ----------------------------------------------------------------------------
def inception_block(p, x, splits):
    o1, r3, r5 = splits
    # guard the fused-1x1 channel layout ([b1 | b2_1 | b3_1]) against repacking
    assert p["fused"][1].shape[0] == o1 + r3 + r5, "fused 1x1 split mismatch"
    assert p["b2_2"][0].shape[1] == r3, "3x3 reducer width mismatch"
    assert p["b3_2"][0].shape[1] == r5, "5x5 reducer width mismatch"
    fused = conv2d_s1(x, p["fused"], ksize=1, padding=0)       # b1 | b2_1 | b3_1
    br1 = fused[..., :o1]
    br2 = conv2d_s1(fused[..., o1:o1 + r3], p["b2_2"], ksize=3, padding=1)
    br3 = conv2d_s1(fused[..., o1 + r3:o1 + r3 + r5], p["b3_2"], ksize=5, padding=2)
    br4 = conv2d_s1(maxpool2d_s1(x, 3, 1), p["b4"], ksize=1, padding=0)
    # torch.cat(dim=1) on NCHW == concat on the channel (last) axis in NHWC
    return jnp.concatenate([br1, br2, br3, br4], axis=-1)


# ----------------------------------------------------------------------------
# full forward (eval mode)
# ----------------------------------------------------------------------------
@jax.jit
def inception_forward(p, x_nchw):
    x = jnp.transpose(x_nchw, (0, 2, 3, 1))                  # NCHW -> NHWC
    x = conv2d_im2col(x, p["conv1"], ksize=7, stride=2, padding=3, relu=True)
    x = maxpool2d_s2(x, 3, 2, 1)
    x = conv2d_s1(x, p["conv2"], ksize=3, padding=1, relu=True)
    x = maxpool2d_s2(x, 3, 2, 1)
    x = inception_block(p["3a"], x, _splits("3a"))
    x = inception_block(p["3b"], x, _splits("3b"))
    x = maxpool2d_s2(x, 3, 2, 1)
    x = inception_block(p["4a"], x, _splits("4a"))
    # TODO(synk): aux1/aux2 heads + Dropout are training-only; eval forward => y=z=None.
    x = inception_block(p["4b"], x, _splits("4b"))
    x = inception_block(p["4c"], x, _splits("4c"))
    x = inception_block(p["4d"], x, _splits("4d"))
    x = inception_block(p["4e"], x, _splits("4e"))
    x = maxpool2d_s2(x, 3, 2, 1)
    x = inception_block(p["5a"], x, _splits("5a"))
    x = inception_block(p["5b"], x, _splits("5b"))
    feats = jnp.mean(x.astype(jnp.float32), axis=(1, 2))     # AvgPool2d(7) @ 7x7
    logits = feats @ p["fc_w"] + p["fc_b"]                   # tiny GEMM -> XLA
    return logits, None, None


# ----------------------------------------------------------------------------
# one-time weight packing (bf16, GEMM layout, fused 1x1 branches)
# ----------------------------------------------------------------------------
def pack_inception(pb):
    w1, b1 = pb["b1"]
    w21, b21 = pb["b2_1"]
    w31, b31 = pb["b3_1"]
    wf = jnp.concatenate([w1, w21, w31], axis=0)             # [b1 | b2_1 | b3_1]
    bf = jnp.concatenate([b1, b21, b31], axis=0)
    return {
        "fused": pack_conv_s1(wf, bf),
        "b2_2": pack_conv_s1(*pb["b2_2"]),
        "b3_2": pack_conv_s1(*pb["b3_2"]),
        "b4": pack_conv_s1(*pb["b4"]),
    }


def pack_params(p):
    q = {
        "conv1": pack_conv_gemm(*p["conv1"]),
        "conv2": pack_conv_s1(*p["conv2"]),
        "fc_w": p["fc_w"].astype(jnp.float32),
        "fc_b": p["fc_b"].astype(jnp.float32),
    }
    for name in INCEPTION_CFG:
        q[name] = pack_inception(p[name])
    return q


# ----------------------------------------------------------------------------
# plain-XLA f32 reference of the same eval-mode module (for validation)
# ----------------------------------------------------------------------------
def _ref_conv(x, wb, stride, pad, relu):
    w, b = wb
    y = jax.lax.conv_general_dilated(
        x, jnp.transpose(w, (2, 3, 1, 0)), (stride, stride),
        ((pad, pad), (pad, pad)),
        dimension_numbers=("NHWC", "HWIO", "NHWC")) + b
    return jnp.maximum(y, 0.0) if relu else y


def _ref_maxpool(x, k, s, pad):
    return jax.lax.reduce_window(
        x, -jnp.inf, jax.lax.max, (1, k, k, 1), (1, s, s, 1),
        ((0, 0), (pad, pad), (pad, pad), (0, 0)))


def _ref_inception(pb, x):
    b1 = _ref_conv(x, pb["b1"], 1, 0, False)
    b2 = _ref_conv(_ref_conv(x, pb["b2_1"], 1, 0, False), pb["b2_2"], 1, 1, False)
    b3 = _ref_conv(_ref_conv(x, pb["b3_1"], 1, 0, False), pb["b3_2"], 1, 2, False)
    b4 = _ref_conv(_ref_maxpool(x, 3, 1, 1), pb["b4"], 1, 0, False)
    return jnp.concatenate([b1, b2, b3, b4], axis=-1)


@jax.jit
def ref_forward(p, x_nchw):
    x = jnp.transpose(x_nchw, (0, 2, 3, 1))
    x = _ref_conv(x, p["conv1"], 2, 3, True)
    x = _ref_maxpool(x, 3, 2, 1)
    x = _ref_conv(x, p["conv2"], 1, 1, True)
    x = _ref_maxpool(x, 3, 2, 1)
    for name in ["3a", "3b"]:
        x = _ref_inception(p[name], x)
    x = _ref_maxpool(x, 3, 2, 1)
    for name in ["4a", "4b", "4c", "4d", "4e"]:
        x = _ref_inception(p[name], x)
    x = _ref_maxpool(x, 3, 2, 1)
    for name in ["5a", "5b"]:
        x = _ref_inception(p[name], x)
    feats = jnp.mean(x, axis=(1, 2))
    return feats @ p["fc_w"] + p["fc_b"]


# ----------------------------------------------------------------------------
# deterministic parameter initialization (PyTorch layout, BN folded for eval)
# ----------------------------------------------------------------------------
class KeyGen:
    def __init__(self, key):
        self.key = key

    def __call__(self):
        self.key, sub = jax.random.split(self.key)
        return sub


def init_conv(kg, o, i, k):
    fan = i * k * k
    w = jax.random.normal(kg(), (o, i, k, k), jnp.float32) / math.sqrt(fan)
    b = 0.01 * jax.random.normal(kg(), (o,), jnp.float32)
    return (w, b)


def init_convblock(kg, i, o, k):
    # Conv2d + BatchNorm2d (eval) folded into a single conv (scale/shift).
    w, b = init_conv(kg, o, i, k)
    gamma = 1.0 + 0.1 * jax.random.normal(kg(), (o,), jnp.float32)
    beta = 0.05 * jax.random.normal(kg(), (o,), jnp.float32)
    mean = 0.05 * jax.random.normal(kg(), (o,), jnp.float32)
    var = 1.0 + 0.1 * jax.random.uniform(kg(), (o,), jnp.float32)
    scale = gamma / jnp.sqrt(var + 1e-5)
    wf = w * scale[:, None, None, None]
    bf = (b - mean) * scale + beta
    return (wf, bf)


def init_inception(kg, c_in, o1, r3, o3, r5, o5, opool):
    return {
        "b1": init_conv(kg, o1, c_in, 1),
        "b2_1": init_conv(kg, r3, c_in, 1),
        "b2_2": init_conv(kg, o3, r3, 3),
        "b3_1": init_conv(kg, r5, c_in, 1),
        "b3_2": init_conv(kg, o5, r5, 5),
        "b4": init_conv(kg, opool, c_in, 1),
    }


def init_params(kg, in_channels=3, num_classes=13):
    p = {
        "conv1": init_convblock(kg, in_channels, 64, 7),
        "conv2": init_convblock(kg, 64, 192, 3),
    }
    for name, cfg in INCEPTION_CFG.items():
        p[name] = init_inception(kg, *cfg)
    p["fc_w"] = jax.random.normal(kg(), (1024, num_classes),
                                  jnp.float32) / math.sqrt(1024.0)
    p["fc_b"] = 0.01 * jax.random.normal(kg(), (num_classes,), jnp.float32)
    return p


# ----------------------------------------------------------------------------
if __name__ == "__main__":
    kg = KeyGen(jax.random.PRNGKey(0))
    params = init_params(kg)
    packed = pack_params(params)

    # per-kernel numerical self-checks (small shapes) against XLA references
    xt = jax.random.normal(kg(), (1, 10, 10, 24), jnp.float32)
    wt = 0.1 * jax.random.normal(kg(), (32, 24, 3, 3), jnp.float32)
    bt = 0.1 * jax.random.normal(kg(), (32,), jnp.float32)
    got = conv2d_s1(xt, pack_conv_s1(wt, bt), ksize=3, padding=1).astype(jnp.float32)
    ref = jax.lax.conv_general_dilated(
        xt, jnp.transpose(wt, (2, 3, 1, 0)), (1, 1), ((1, 1), (1, 1)),
        dimension_numbers=("NHWC", "HWIO", "NHWC")) + bt
    rel = float(jnp.max(jnp.abs(got - ref)) / (jnp.max(jnp.abs(ref)) + 1e-6))
    assert rel < 3e-2, f"conv3x3 self-check failed, rel err {rel}"

    xb = xt.astype(jnp.bfloat16).astype(jnp.float32)   # pooling is exact in bf16
    got_p1 = maxpool2d_s1(xt, 3, 1).astype(jnp.float32)
    ref_p1 = jax.lax.reduce_window(xb, -jnp.inf, jax.lax.max, (1, 3, 3, 1),
                                   (1, 1, 1, 1), ((0, 0), (1, 1), (1, 1), (0, 0)))
    assert bool(jnp.allclose(got_p1, ref_p1)), "stride-1 maxpool self-check failed"
    got_p2 = maxpool2d_s2(xt, 3, 2, 1).astype(jnp.float32)
    ref_p2 = jax.lax.reduce_window(xb, -jnp.inf, jax.lax.max, (1, 3, 3, 1),
                                   (1, 2, 2, 1), ((0, 0), (1, 1), (1, 1), (0, 0)))
    assert bool(jnp.allclose(got_p2, ref_p2)), "stride-2 maxpool self-check failed"

    # GoogleNet geometry: 224x224 input so AvgPool2d(7) -> 1x1 and the flatten
    # matches Linear(1024, num_classes).  Batch kept at 1 for the demo.
    x = jax.random.normal(kg(), (1, 3, 224, 224), jnp.float32)

    logits, y, z = inception_forward(packed, x)
    logits = jax.block_until_ready(logits)
    assert logits.shape == (1, 13), logits.shape
    assert y is None and z is None
    assert bool(jnp.all(jnp.isfinite(logits)))

    # end-to-end validation vs the plain-XLA f32 eval-mode model (loose tol:
    # the Pallas path runs bf16 activations/weights with f32 accumulation).
    ref_logits = jax.block_until_ready(ref_forward(params, x))
    e2e = float(jnp.max(jnp.abs(logits.astype(jnp.float32) - ref_logits)) /
                (jnp.max(jnp.abs(ref_logits)) + 1e-6))
    assert e2e < 0.2, f"end-to-end mismatch vs f32 reference: {e2e}"

    print("KERNEL_OK")
</pallas_src>

<mosaic_0001>
module attributes {stable_mosaic.version = 11 : i64} {
  func.func @_shift_conv_kernel(%arg0: i32, %arg1: i32, %arg2: memref<232x24xbf16, #tpu.memory_space<vmem>>, %arg3: memref<9x24x128xbf16, #tpu.memory_space<vmem>>, %arg4: memref<1x128xf32, #tpu.memory_space<vmem>>, %arg5: memref<96x128xbf16, #tpu.memory_space<vmem>>) attributes {dimension_semantics = [#tpu.dimension_semantics<parallel>, #tpu.dimension_semantics<parallel>], iteration_bounds = array<i64: 2, 1>, scalar_prefetch = 0 : i64, scratch_operands = 0 : i64, tpu.core_type = #tpu.core_type<tc>, window_params = [{pipeline_mode = #tpu.pipeline_mode<synchronous>, transform_indices = @transform_0, window_bounds = array<i64: 232, 24>}, {transform_indices = @transform_1, window_bounds = array<i64: 9, 24, 128>}, {transform_indices = @transform_2, window_bounds = array<i64: 1, 128>}, {transform_indices = @transform_3, window_bounds = array<i64: 96, 128>}]} {
    %c96_i32 = arith.constant 96 : i32
    %0 = arith.muli %arg0, %c96_i32 : i32
    %1 = tpu.assume_multiple %0, 8 : i32
    %cst = arith.constant 0.000000e+00 : f32
    %2 = vector.broadcast %cst : f32 to vector<96x128xf32>
    %c0_i32 = arith.constant 0 : i32
    %3 = arith.addi %1, %c0_i32 : i32
    %4 = arith.index_cast %3 : i32 to index
    %c0 = arith.constant 0 : index
    %5 = vector.load %arg2[%4, %c0] : memref<232x24xbf16, #tpu.memory_space<vmem>>, vector<104x24xbf16>
    %c0_0 = arith.constant 0 : index
    %c0_1 = arith.constant 0 : index
    %c0_2 = arith.constant 0 : index
    %6 = vector.load %arg3[%c0_0, %c0_1, %c0_2] : memref<9x24x128xbf16, #tpu.memory_space<vmem>>, vector<1x24x128xbf16>
    %7 = vector.shape_cast %6 : vector<1x24x128xbf16> to vector<24x128xbf16>
    %cst_3 = arith.constant dense<0.000000e+00> : vector<104x128xf32>
    %8 = tpu.matmul %5, %7, %cst_3 {dimension_numbers = #tpu.dot_dimension_numbers<[1], [0], [0], [1], [0, 0, 1, 1], [], []>} : vector<104x24xbf16>, vector<24x128xbf16>, vector<104x128xf32> -> vector<104x128xf32>
    %9 = vector.extract_strided_slice %8 {offsets = [0, 0], sizes = [96, 128], strides = [1, 1]} : vector<104x128xf32> to vector<96x128xf32>
    %10 = arith.addf %2, %9 : vector<96x128xf32>
    %c1 = arith.constant 1 : index
    %c0_4 = arith.constant 0 : index
    %c0_5 = arith.constant 0 : index
    %11 = vector.load %arg3[%c1, %c0_4, %c0_5] : memref<9x24x128xbf16, #tpu.memory_space<vmem>>, vector<1x24x128xbf16>
    %12 = vector.shape_cast %11 : vector<1x24x128xbf16> to vector<24x128xbf16>
    %cst_6 = arith.constant dense<0.000000e+00> : vector<104x128xf32>
    %13 = tpu.matmul %5, %12, %cst_6 {dimension_numbers = #tpu.dot_dimension_numbers<[1], [0], [0], [1], [0, 0, 1, 1], [], []>} : vector<104x24xbf16>, vector<24x128xbf16>, vector<104x128xf32> -> vector<104x128xf32>
    %14 = vector.extract_strided_slice %13 {offsets = [1, 0], sizes = [96, 128], strides = [1, 1]} : vector<104x128xf32> to vector<96x128xf32>
    %15 = arith.addf %10, %14 : vector<96x128xf32>
    %c2 = arith.constant 2 : index
    %c0_7 = arith.constant 0 : index
    %c0_8 = arith.constant 0 : index
    %16 = vector.load %arg3[%c2, %c0_7, %c0_8] : memref<9x24x128xbf16, #tpu.memory_space<vmem>>, vector<1x24x128xbf16>
    %17 = vector.shape_cast %16 : vector<1x24x128xbf16> to vector<24x128xbf16>
    %cst_9 = arith.constant dense<0.000000e+00> : vector<104x128xf32>
    %18 = tpu.matmul %5, %17, %cst_9 {dimension_numbers = #tpu.dot_dimension_numbers<[1], [0], [0], [1], [0, 0, 1, 1], [], []>} : vector<104x24xbf16>, vector<24x128xbf16>, vector<104x128xf32> -> vector<104x128xf32>
    %19 = vector.extract_strided_slice %18 {offsets = [2, 0], sizes = [96, 128], strides = [1, 1]} : vector<104x128xf32> to vector<96x128xf32>
    %20 = arith.addf %15, %19 : vector<96x128xf32>
    %c16_i32 = arith.constant 16 : i32
    %21 = arith.addi %1, %c16_i32 : i32
    %22 = arith.index_cast %21 : i32 to index
    %c0_10 = arith.constant 0 : index
    %23 = vector.load %arg2[%22, %c0_10] : memref<232x24xbf16, #tpu.memory_space<vmem>>, vector<104x24xbf16>
    %c3 = arith.constant 3 : index
    %c0_11 = arith.constant 0 : index
    %c0_12 = arith.constant 0 : index
    %24 = vector.load %arg3[%c3, %c0_11, %c0_12] : memref<9x24x128xbf16, #tpu.memory_space<vmem>>, vector<1x24x128xbf16>
    %25 = vector.shape_cast %24 : vector<1x24x128xbf16> to vector<24x128xbf16>
    %cst_13 = arith.constant dense<0.000000e+00> : vector<104x128xf32>
    %26 = tpu.matmul %23, %25, %cst_13 {dimension_numbers = #tpu.dot_dimension_numbers<[1], [0], [0], [1], [0, 0, 1, 1], [], []>} : vector<104x24xbf16>, vector<24x128xbf16>, vector<104x128xf32> -> vector<104x128xf32>
    %27 = vector.extract_strided_slice %26 {offsets = [0, 0], sizes = [96, 128], strides = [1, 1]} : vector<104x128xf32> to vector<96x128xf32>
    %28 = arith.addf %20, %27 : vector<96x128xf32>
    %c4 = arith.constant 4 : index
    %c0_14 = arith.constant 0 : index
    %c0_15 = arith.constant 0 : index
    %29 = vector.load %arg3[%c4, %c0_14, %c0_15] : memref<9x24x128xbf16, #tpu.memory_space<vmem>>, vector<1x24x128xbf16>
    %30 = vector.shape_cast %29 : vector<1x24x128xbf16> to vector<24x128xbf16>
    %cst_16 = arith.constant dense<0.000000e+00> : vector<104x128xf32>
    %31 = tpu.matmul %23, %30, %cst_16 {dimension_numbers = #tpu.dot_dimension_numbers<[1], [0], [0], [1], [0, 0, 1, 1], [], []>} : vector<104x24xbf16>, vector<24x128xbf16>, vector<104x128xf32> -> vector<104x128xf32>
    %32 = vector.extract_strided_slice %31 {offsets = [1, 0], sizes = [96, 128], strides = [1, 1]} : vector<104x128xf32> to vector<96x128xf32>
    %33 = arith.addf %28, %32 : vector<96x128xf32>
    %c5 = arith.constant 5 : index
    %c0_17 = arith.constant 0 : index
    %c0_18 = arith.constant 0 : index
    %34 = vector.load %arg3[%c5, %c0_17, %c0_18] : memref<9x24x128xbf16, #tpu.memory_space<vmem>>, vector<1x24x128xbf16>
    %35 = vector.shape_cast %34 : vector<1x24x128xbf16> to vector<24x128xbf16>
    %cst_19 = arith.constant dense<0.000000e+00> : vector<104x128xf32>
    %36 = tpu.matmul %23, %35, %cst_19 {dimension_numbers = #tpu.dot_dimension_numbers<[1], [0], [0], [1], [0, 0, 1, 1], [], []>} : vector<104x24xbf16>, vector<24x128xbf16>, vector<104x128xf32> -> vector<104x128xf32>
    %37 = vector.extract_strided_slice %36 {offsets = [2, 0], sizes = [96, 128], strides = [1, 1]} : vector<104x128xf32> to vector<96x128xf32>
    %38 = arith.addf %33, %37 : vector<96x128xf32>
    %c32_i32 = arith.constant 32 : i32
    %39 = arith.addi %1, %c32_i32 : i32
    %40 = arith.index_cast %39 : i32 to index
    %c0_20 = arith.constant 0 : index
    %41 = vector.load %arg2[%40, %c0_20] : memref<232x24xbf16, #tpu.memory_space<vmem>>, vector<104x24xbf16>
    %c6 = arith.constant 6 : index
    %c0_21 = arith.constant 0 : index
    %c0_22 = arith.constant 0 : index
    %42 = vector.load %arg3[%c6, %c0_21, %c0_22] : memref<9x24x128xbf16, #tpu.memory_space<vmem>>, vector<1x24x128xbf16>
    %43 = vector.shape_cast %42 : vector<1x24x128xbf16> to vector<24x128xbf16>
    %cst_23 = arith.constant dense<0.000000e+00> : vector<104x128xf32>
    %44 = tpu.matmul %41, %43, %cst_23 {dimension_numbers = #tpu.dot_dimension_numbers<[1], [0], [0], [1], [0, 0, 1, 1], [], []>} : vector<104x24xbf16>, vector<24x128xbf16>, vector<104x128xf32> -> vector<104x128xf32>
    %45 = vector.extract_strided_slice %44 {offsets = [0, 0], sizes = [96, 128], strides = [1, 1]} : vector<104x128xf32> to vector<96x128xf32>
    %46 = arith.addf %38, %45 : vector<96x128xf32>
    %c7 = arith.constant 7 : index
    %c0_24 = arith.constant 0 : index
    %c0_25 = arith.constant 0 : index
    %47 = vector.load %arg3[%c7, %c0_24, %c0_25] : memref<9x24x128xbf16, #tpu.memory_space<vmem>>, vector<1x24x128xbf16>
    %48 = vector.shape_cast %47 : vector<1x24x128xbf16> to vector<24x128xbf16>
    %cst_26 = arith.constant dense<0.000000e+00> : vector<104x128xf32>
    %49 = tpu.matmul %41, %48, %cst_26 {dimension_numbers = #tpu.dot_dimension_numbers<[1], [0], [0], [1], [0, 0, 1, 1], [], []>} : vector<104x24xbf16>, vector<24x128xbf16>, vector<104x128xf32> -> vector<104x128xf32>
    %50 = vector.extract_strided_slice %49 {offsets = [1, 0], sizes = [96, 128], strides = [1, 1]} : vector<104x128xf32> to vector<96x128xf32>
    %51 = arith.addf %46, %50 : vector<96x128xf32>
    %c8 = arith.constant 8 : index
    %c0_27 = arith.constant 0 : index
    %c0_28 = arith.constant 0 : index
    %52 = vector.load %arg3[%c8, %c0_27, %c0_28] : memref<9x24x128xbf16, #tpu.memory_space<vmem>>, vector<1x24x128xbf16>
    %53 = vector.shape_cast %52 : vector<1x24x128xbf16> to vector<24x128xbf16>
    %cst_29 = arith.constant dense<0.000000e+00> : vector<104x128xf32>
    %54 = tpu.matmul %41, %53, %cst_29 {dimension_numbers = #tpu.dot_dimension_numbers<[1], [0], [0], [1], [0, 0, 1, 1], [], []>} : vector<104x24xbf16>, vector<24x128xbf16>, vector<104x128xf32> -> vector<104x128xf32>
    %55 = vector.extract_strided_slice %54 {offsets = [2, 0], sizes = [96, 128], strides = [1, 1]} : vector<104x128xf32> to vector<96x128xf32>
    %56 = arith.addf %51, %55 : vector<96x128xf32>
    %c0_30 = arith.constant 0 : index
    %c0_31 = arith.constant 0 : index
    %57 = vector.load %arg4[%c0_30, %c0_31] : memref<1x128xf32, #tpu.memory_space<vmem>>, vector<1x128xf32>
    %58 = vector.broadcast %57 : vector<1x128xf32> to vector<96x128xf32>
    %59 = arith.addf %56, %58 : vector<96x128xf32>
    %60 = arith.truncf %59 : vector<96x128xf32> to vector<96x128xbf16>
    %c0_32 = arith.constant 0 : index
    %c0_33 = arith.constant 0 : index
    %61 = vector.load %arg5[%c0_32, %c0_33] : memref<96x128xbf16, #tpu.memory_space<vmem>>, vector<96x128xbf16>
    tpu.vector_store %arg5[%c0_32, %c0_33], %60 {strides = array<i32>} : memref<96x128xbf16, #tpu.memory_space<vmem>>, vector<96x128xbf16>,
    return
  }
  func.func @transform_0(%arg0: i32, %arg1: i32) -> (i32, i32) {
    %c0_i32 = arith.constant 0 : i32
    %c0_i32_0 = arith.constant 0 : i32
    %c0_i32_1 = arith.constant 0 : i32
    return %c0_i32, %c0_i32_0 : i32, i32
  }
  func.func @transform_1(%arg0: i32, %arg1: i32) -> (i32, i32, i32) {
    %c0_i32 = arith.constant 0 : i32
    %c0_i32_0 = arith.constant 0 : i32
    %c0_i32_1 = arith.constant 0 : i32
    return %c0_i32, %c0_i32_0, %arg1 : i32, i32, i32
  }
  func.func @transform_2(%arg0: i32, %arg1: i32) -> (i32, i32) {
    %c0_i32 = arith.constant 0 : i32
    %c0_i32_0 = arith.constant 0 : i32
    return %c0_i32, %arg1 : i32, i32
  }
  func.func @transform_3(%arg0: i32, %arg1: i32) -> (i32, i32) {
    %c0_i32 = arith.constant 0 : i32
    return %arg0, %arg1 : i32, i32
  }
}

</mosaic_0001>

<llo_original>
// kernel: tpu_custom_call.1
$region0: #{tpu_custom_call.1}
  #allocation0 [shape = 'u32[]', space=smem, size = 0x4, offset = 0x4, fixed_abs, tag = 'smem constant byte address 0x4 - core index']
  #allocation1 [shape = 'u32[144,128]{1,0:T(1,128)}', space=vmem, size = 0x12000, scoped, tag = 'internal scratch']
  %s0 = inlined_call_operand.vmem [shape: bf16[232,24], index: 0, kind: input, shape index: {}]
  %s1 = inlined_call_operand.vmem [shape: bf16[9,24,128], index: 1, kind: input, shape index: {}]
  %s2 = inlined_call_operand.vmem [shape: f32[1,128], index: 2, kind: input, shape index: {}]
  %s3 = inlined_call_operand.hbm [shape: bf16[192,128], index: 3, kind: output, shape index: {}]
  %s4 = sld [smem:[#allocation0]]
  $region45: #{tpu_custom_call.1} parent=0
    _
  %s6 = ssub.s32 1, %s4
  %s7 = scalar_select 0, %s6, %s4
  $region1: #{tpu_custom_call.1} parent=0
    #allocation2 [shape = 'u8[49152]{0}', space=vmem, size = 0xc000, scoped, tag = 'output window, operand 0']
    #allocation3 [shape = 's32[2]{0}', space=sflag, size = 0x8, scoped, tag = 'scoped memory for tpu_custom_call.1']
    %8 = vsyncpa [#allocation3], 0
    %s9 = scalar_lea.sflag [#allocation3], 1
    %10 = vsyncpa %s9, 0
    loop: start=0, step=1, limit=4
    $region2: #{tpu_custom_call.1} parent=1 // loop_pre_header
      _
    $region3: #{tpu_custom_call.1} parent=1 // loop_header
      %s12 = sphi 0, %s16
      %p13 = scmp.ge.s32.totalorder %s12, 4
      %s19 = sphi 0, %s31
      %s20 = sphi 0, %s27
      %s21 = sphi 0, %s19
      %s22 = sphi 0, %s20
      %s23 = sphi 0, %s21
      %s24 = sphi 0, %s22
      %s32 = sphi 0, %s32
      %s34 = sphi 0, %s32
      %s35 = sphi 0, %s34
      %s49 = sphi 0, %s35
      %s55 = sphi 0, %s57
      %s58 = sphi 0, %s55
      %s59 = sphi 0, %s58
      %s75 = sphi 0, %s59
      %s81 = sphi 0, %s83
      %s84 = sphi 0, %s81
      %s85 = sphi 0, %s84
      %s101 = sphi 0, %s85
      %s109 = sphi 0, %s111
      %s112 = sphi 0, %s109
      %s113 = sphi 0, %s112
      %s129 = sphi 0, %s113
    $region4: #{tpu_custom_call.1} parent=1 // loop_header_branch
      %15 = sbr.rel (%p13) target = $region8
    $region5: #{tpu_custom_call.1} parent=1 // loop_body
      %s17 = ssub.s32 %s12, 1
      %s18 = ssub.s32 %s12, 2
      %s25 = sadd.s32 1, %s20
      %p26 = scmp.ge.s32.totalorder %s25, 1
      %s27 = scalar_select %p26, 0, %s25
      %s28 = sadd.s32 1, %s19
      %s29 = scalar_select %p26, %s28, %s19
      %p30 = scmp.ge.s32.totalorder %s29, 2
      %s31 = scalar_select %p30, 0, %s29
      %s33 = sadd.s32 %s32, 1
      %p36 = scmp.eq.s32.totalorder %s12, 1
      %p37 = scmp.ne.s32.totalorder %s32, %s34
      %p38 = scmp.eq.s32.totalorder %s12, 0
      %p39 = por %p37, %p38
      %p40 = scmp.ne.s32.totalorder %s32, %s34
      %p41 = scmp.eq.s32.totalorder %s17, 1
      %p42 = por %p40, %p41
      %p43 = scmp.ne.s32.totalorder %s34, %s35
      %p44 = scmp.eq.s32.totalorder %s17, 0
      %p45 = por %p43, %p44
      %p46 = scmp.ne.s32.totalorder %s34, %s35
      %p47 = scmp.eq.s32.totalorder %s18, 1
      %p48 = por %p46, %p47
      %p50 = scmp.ne.s32.totalorder %s35, %s49
      %p51 = scmp.eq.s32.totalorder %s18, 0
      %p52 = por %p50, %p51
      %s53 = ssub.s32 %s20, %s27
      %p54 = scmp.eq.s32.totalorder %s53, 0
      %s56 = sadd.s32 %s55, 1
      %s57 = scalar_select %p54, %s55, %s56
      %p60 = pneg %p54
      %p61 = scmp.eq.s32.totalorder %s12, 1
      %p62 = por %p60, %p61
      %p63 = scmp.ne.s32.totalorder %s55, %s58
      %p64 = scmp.eq.s32.totalorder %s12, 0
      %p65 = por %p63, %p64
      %p66 = scmp.ne.s32.totalorder %s55, %s58
      %p67 = scmp.eq.s32.totalorder %s17, 1
      %p68 = por %p66, %p67
      %p69 = scmp.ne.s32.totalorder %s58, %s59
      %p70 = scmp.eq.s32.totalorder %s17, 0
      %p71 = por %p69, %p70
      %p72 = scmp.ne.s32.totalorder %s58, %s59
      %p73 = scmp.eq.s32.totalorder %s18, 1
      %p74 = por %p72, %p73
      %p76 = scmp.ne.s32.totalorder %s59, %s75
      %p77 = scmp.eq.s32.totalorder %s18, 0
      %p78 = por %p76, %p77
      %s79 = ssub.s32 %s20, %s27
      %p80 = scmp.eq.s32.totalorder %s79, 0
      %s82 = sadd.s32 %s81, 1
      %s83 = scalar_select %p80, %s81, %s82
      %p86 = pneg %p80
      %p87 = scmp.eq.s32.totalorder %s12, 1
      %p88 = por %p86, %p87
      %p89 = scmp.ne.s32.totalorder %s81, %s84
      %p90 = scmp.eq.s32.totalorder %s12, 0
      %p91 = por %p89, %p90
      %p92 = scmp.ne.s32.totalorder %s81, %s84
      %p93 = scmp.eq.s32.totalorder %s17, 1
      %p94 = por %p92, %p93
      %p95 = scmp.ne.s32.totalorder %s84, %s85
      %p96 = scmp.eq.s32.totalorder %s17, 0
      %p97 = por %p95, %p96
      %p98 = scmp.ne.s32.totalorder %s84, %s85
      %p99 = scmp.eq.s32.totalorder %s18, 1
      %p100 = por %p98, %p99
      %p102 = scmp.ne.s32.totalorder %s85, %s101
      %p103 = scmp.eq.s32.totalorder %s18, 0
      %p104 = por %p102, %p103
      %s105 = ssub.s32 %s19, %s31
      %s106 = ssub.s32 %s20, %s27
      %s107 = sor.u32 %s105, %s106
      %p108 = scmp.eq.s32.totalorder %s107, 0
      %s110 = sadd.s32 %s109, 1
      %s111 = scalar_select %p108, %s109, %s110
      %p114 = pneg %p108
      %p115 = scmp.eq.s32.totalorder %s12, 1
      %p116 = por %p114, %p115
      %p117 = scmp.ne.s32.totalorder %s109, %s112
      %p118 = scmp.eq.s32.totalorder %s12, 0
      %p119 = por %p117, %p118
      %p120 = scmp.ne.s32.totalorder %s109, %s112
      %p121 = scmp.eq.s32.totalorder %s17, 1
      %p122 = por %p120, %p121
      %p123 = scmp.ne.s32.totalorder %s112, %s113
      %p124 = scmp.eq.s32.totalorder %s17, 0
      %p125 = por %p123, %p124
      %p126 = scmp.ne.s32.totalorder %s112, %s113
      %p127 = scmp.eq.s32.totalorder %s18, 1
      %p128 = por %p126, %p127
      %p130 = scmp.ne.s32.totalorder %s113, %s129
      %p131 = scmp.eq.s32.totalorder %s18, 0
      %p132 = por %p130, %p131
      %p133 = scmp.le.s32.totalorder 1, %s12
      %p134 = scmp.lt.s32.totalorder %s12, 3
      %p135 = pnand %p133, %p134
      %p136 = pneg %p135
      // Predicated region
      $region9: #{tpu_custom_call.1} parent=5 // pred_check
        _
      $region10: #{tpu_custom_call.1} parent=5 // pred_check_branch
        %138 = sbr.rel (%p135) target = $region12
      $region11: #{tpu_custom_call.1} parent=5 // pred_region
        %s139 = ssub.s32 %s12, 1
        // Predicated region
        $region13: #{tpu_custom_call.1} parent=11 // pred_check
          %p140 = pneg %p45
        $region14: #{tpu_custom_call.1} parent=11 // pred_check_branch
          %142 = sbr.rel (%p140) target = $region16
        $region15: #{tpu_custom_call.1} parent=11 // pred_region
          _
        $region16: #{tpu_custom_call.1} parent=11 // pred_fallthru
          _
        // Predicated region
        $region17: #{tpu_custom_call.1} parent=11 // pred_check
          %p143 = pneg %p71
        $region18: #{tpu_custom_call.1} parent=11 // pred_check_branch
          %145 = sbr.rel (%p143) target = $region20
        $region19: #{tpu_custom_call.1} parent=11 // pred_region
          %p146 = scmp.lt.s32.totalorder %s22, 0
          %s147 = scalar_select %p146, %s22, 0
          %s148 = smul.addr %s147, 4
          %s149 = scalar_lea.vmem %s1, %s148
        $region20: #{tpu_custom_call.1} parent=11 // pred_fallthru
          _
        // Predicated region
        $region21: #{tpu_custom_call.1} parent=11 // pred_check
          %p150 = pneg %p97
        $region22: #{tpu_custom_call.1} parent=11 // pred_check_branch
          %152 = sbr.rel (%p150) target = $region24
        $region23: #{tpu_custom_call.1} parent=11 // pred_region
          %p153 = scmp.lt.s32.totalorder %s22, 0
          %s154 = scalar_select %p153, %s22, 0
          %s155 = scalar_lea.vmem %s2, %s154
        $region24: #{tpu_custom_call.1} parent=11 // pred_fallthru
          _
      $region12: #{tpu_custom_call.1} parent=5 // pred_fallthru
        _
      %p156 = scmp.lt.s32.totalorder %s12, 2
      // Predicated region
      $region25: #{tpu_custom_call.1} parent=5 // pred_check
        %p157 = pneg %p156
      $region26: #{tpu_custom_call.1} parent=5 // pred_check_branch
        %159 = sbr.rel (%p157) target = $region28
      $region27: #{tpu_custom_call.1} parent=5 // pred_region
        _
      $region28: #{tpu_custom_call.1} parent=5 // pred_fallthru
        _
      %p160 = scmp.le.s32.totalorder 1, %s12
      %p161 = scmp.lt.s32.totalorder %s12, 3
      %p162 = pnand %p160, %p161
      %p163 = pneg %p162
      // Predicated region
      $region29: #{tpu_custom_call.1} parent=5 // pred_check
        _
      $region30: #{tpu_custom_call.1} parent=5 // pred_check_branch
        %165 = sbr.rel (%p162) target = $region32
      $region31: #{tpu_custom_call.1} parent=5 // pred_region
        %s166 = ssub.s32 %s12, 1
        %p167 = pneg %p45
        %p168 = pneg %p42
        %p169 = scmp.lt.s32.totalorder %s22, 0
        %s170 = scalar_select %p169, %s22, 0
        %s171 = smul.addr %s170, 4
        %s172 = scalar_lea.vmem %s1, %s171
        %p173 = pneg %p71
        %p174 = pneg %p68
        %p175 = scmp.lt.s32.totalorder %s22, 0
        %s176 = scalar_select %p175, %s22, 0
        %s177 = scalar_lea.vmem %s2, %s176
        %p178 = pneg %p97
        %p179 = pneg %p94
        %p180 = pneg %p125
        %p181 = pneg %p122
        %s182 = sand.u32 %s112, 1
        %s183 = scalar_lea.sflag [#allocation3], %s182
        %s184 = sand.u32 %s112, 1
        %s185 = smul.addr %s184, 48
        %s186 = scalar_lea.vmem [#allocation2], %s185
        %p187 = scmp.lt.s32.totalorder %s22, 0
        %s188 = scalar_select %p187, %s22, 0
        %s189 = smul.addr %s188, 4
        %s190 = scalar_lea.vmem %s1, %s189
        %p191 = scmp.lt.s32.totalorder %s22, 0
        %s192 = scalar_select %p191, %s22, 0
        %s193 = scalar_lea.vmem %s2, %s192
        %s194 = smul.u32 12, %s21
        %s196 = smul.u32 %s21, 96
        %s197 = sshra.s32 %s196, 3
        %s198 = sand.u32 %s196, 7
        %s199 = smul.addr %s197, 4
        %s200 = scalar_lea.vmem %s0, %s199
        %v201 = vld [vmem:[%s200] sm:$0xf]
        %v202 = vld [vmem:[%s200 + $0x4] sm:$0xf]
        %v203 = vld [vmem:[%s200 + $0x8] sm:$0xf]
        %v204 = vld [vmem:[%s200 + $0xc] sm:$0xf]
        %v205 = vld [vmem:[%s200 + $0x10] sm:$0xf]
        %v206 = vld [vmem:[%s200 + $0x14] sm:$0xf]
        %v207 = vld [vmem:[%s200 + $0x18] sm:$0xf]
        %v208 = vld [vmem:[%s200 + $0x1c] sm:$0xf]
        %v209 = vld [vmem:[%s200 + $0x20] sm:$0xf]
        %v210 = vld [vmem:[%s200 + $0x24] sm:$0xf]
        %v211 = vld [vmem:[%s200 + $0x28] sm:$0xf]
        %v212 = vld [vmem:[%s200 + $0x2c] sm:$0xf]
        %v213 = vld [vmem:[%s200 + $0x30] sm:$0xf]
        %v214 = vld [vmem:[%s190] sm:$0xf]
        %v215 = vld [vmem:[%s190 + $0x4] sm:$0xf]
        %v216 = vld [vmem:[%s190 + $0x8] sm:$0xf]
        %v230 = vunpack.c.l.b16 %v201
        %v231 = vunpack.c.l.b16 %v202
        %v232 = vunpack.c.l.b16 %v203
        %v233 = vunpack.c.l.b16 %v204
        %v234 = vunpack.c.l.b16 %v205
        %v235 = vunpack.c.l.b16 %v206
        %v236 = vunpack.c.l.b16 %v207
        %v237 = vunpack.c.l.b16 %v208
        %v238 = vunpack.c.l.b16 %v209
        %v239 = vunpack.c.l.b16 %v210
        %v240 = vunpack.c.l.b16 %v211
        %v241 = vunpack.c.l.b16 %v212
        %v242 = vunpack.c.l.b16 %v213
        %v243 = vpack.c.b16 %v231, %v230
        %v244 = vpack.c.b16 %v233, %v232
        %v245 = vpack.c.b16 %v235, %v234
        %v246 = vpack.c.b16 %v237, %v236
        %v247 = vpack.c.b16 %v239, %v238
        %v248 = vpack.c.b16 %v241, %v240
        %v249 = vpack.c.b16 %v242, %v242
        %v253 = vunpack.c.l.b16 %v214
        %v254 = vunpack.c.l.b16 %v215
        %v255 = vunpack.c.l.b16 %v216
        %v256 = vpack.c.b16 %v254, %v253
        %v257 = vpack.c.b16 %v255, %v255
        %vm259 = vcmask 195584
        %v261 = vsel %vm259, %v243, 0
        %v264 = vsel %vm259, %v244, 0
        %v267 = vsel %vm259, %v245, 0
        %v270 = vsel %vm259, %v246, 0
        %v273 = vsel %vm259, %v247, 0
        %v276 = vsel %vm259, %v248, 0
        %v279 = vsel %vm259, %v249, 0
        %vm281 = vcmask 1043456
        %v283 = vsel %vm281, %v257, 0
        %285 = vmatprep.subr.bf16.mxu0 0
        %286 = vmatpush1.bf16.msra.mxu0 %v256
        %287 = vmatprep.subr.bf16.mxu0 0
        %288 = vmatpush1.bf16.msra.mxu0 %v283
        %289 = vmatprep.subr.bf16.mxu0 0
        %290 = vmatpush1.bf16.msra.mxu0 0
        %291 = vmatprep.subr.bf16.mxu0 0
        %292 = vmatpush1.bf16.msra.mxu0 0
        %293 = vmatprep.subr.bf16.mxu0 0
        %294 = vmatpush1.bf16.msra.mxu0 0
        %295 = vmatprep.subr.bf16.mxu0 0
        %296 = vmatpush1.bf16.msra.mxu0 0
        %297 = vmatprep.subr.bf16.mxu0 0
        %298 = vmatpush1.bf16.msra.mxu0 0
        %299 = vmatprep.subr.bf16.mxu0 0
        %300 = vmatpush1.bf16.msra.mxu0 0
        %301 = vmatprep.subr.bf16.mxu0 0
        %302 = vmatpush1.bf16.msra.mxu0 0
        %303 = vmatprep.subr.bf16.mxu0 0
        %304 = vmatpush1.bf16.msra.mxu0 0
        %305 = vmatprep.subr.bf16.mxu0 0
        %306 = vmatpush1.bf16.msra.mxu0 0
        %307 = vmatprep.subr.bf16.mxu0 0
        %308 = vmatpush1.bf16.msra.mxu0 0
        %309 = vmatprep.subr.bf16.mxu0 0
        %310 = vmatpush1.bf16.msra.mxu0 0
        %311 = vmatprep.subr.bf16.mxu0 0
        %312 = vmatpush1.bf16.msra.mxu0 0
        %313 = vmatprep.subr.bf16.mxu0 0
        %314 = vmatpush1.bf16.msra.mxu0 0
        %315 = vmatprep.subr.bf16.mxu0 0
        %316 = vmatpush1.bf16.msra.mxu0 0
        %317 = vmatprep.mubr.bf16.mxu0 0
        %318 = vmatmul.mubr.bf16.gmra.mrb[0].mxu0 %v261
        %v319 = vpop.f32.mrb[0].mxu0
        %v320 = vadd.f32 0.0, %v319
        %v321 = vpop.f32.mrb[0].mxu0
        %v322 = vpop.f32.mrb[0].mxu0
        %v323 = vadd.f32 0.0, %v322
        %v324 = vpop.f32.mrb[0].mxu0
        %325 = vmatprep.mubr.bf16.mxu0 0
        %326 = vmatmul.mubr.bf16.gmra.mrb[0].mxu0 %v264
        %v327 = vpop.f32.mrb[0].mxu0
        %v328 = vadd.f32 0.0, %v327
        %v329 = vpop.f32.mrb[0].mxu0
        %v330 = vpop.f32.mrb[0].mxu0
        %v331 = vadd.f32 0.0, %v330
        %v332 = vpop.f32.mrb[0].mxu0
        %333 = vmatprep.mubr.bf16.mxu0 0
        %334 = vmatmul.mubr.bf16.gmra.mrb[0].mxu0 %v267
        %v335 = vpop.f32.mrb[0].mxu0
        %v336 = vadd.f32 0.0, %v335
        %v337 = vpop.f32.mrb[0].mxu0
        %v338 = vpop.f32.mrb[0].mxu0
        %v339 = vadd.f32 0.0, %v338
        %v340 = vpop.f32.mrb[0].mxu0
        %341 = vmatprep.mubr.bf16.mxu0 0
        %342 = vmatmul.mubr.bf16.gmra.mrb[0].mxu0 %v270
        %v343 = vpop.f32.mrb[0].mxu0
        %v344 = vadd.f32 0.0, %v343
        %v345 = vpop.f32.mrb[0].mxu0
        %v346 = vpop.f32.mrb[0].mxu0
        %v347 = vadd.f32 0.0, %v346
        %v348 = vpop.f32.mrb[0].mxu0
        %349 = vmatprep.mubr.bf16.mxu0 0
        %350 = vmatmul.mubr.bf16.gmra.mrb[0].mxu0 %v273
        %v351 = vpop.f32.mrb[0].mxu0
        %v352 = vadd.f32 0.0, %v351
        %v353 = vpop.f32.mrb[0].mxu0
        %v354 = vpop.f32.mrb[0].mxu0
        %v355 = vadd.f32 0.0, %v354
        %v356 = vpop.f32.mrb[0].mxu0
        %357 = vmatprep.mubr.bf16.mxu0 0
        %358 = vmatmul.mubr.bf16.gmra.mrb[0].mxu0 %v276
        %v359 = vpop.f32.mrb[0].mxu0
        %v360 = vadd.f32 0.0, %v359
        %v361 = vpop.f32.mrb[0].mxu0
        %v362 = vpop.f32.mrb[0].mxu0
        %v363 = vadd.f32 0.0, %v362
        %v364 = vpop.f32.mrb[0].mxu0
        %365 = vmatprep.mubr.bf16.mxu0 0
        %366 = vmatmul.mubr.bf16.gmra.mrb[0].mxu0 %v279
        %v367 = vpop.f32.mrb[0].mxu0
        %v368 = vpop.f32.mrb[0].mxu0
        %v369 = vpop.f32.mrb[0].mxu0
        %v370 = vpop.f32.mrb[0].mxu0
        %371 = vdwg.mxu0
        %v372 = vadd.f32 %v320, 0.0
        %v373 = vadd.f32 %v323, 0.0
        %v374 = vadd.f32 %v328, 0.0
        %v375 = vadd.f32 %v331, 0.0
        %v376 = vadd.f32 %v336, 0.0
        %v377 = vadd.f32 %v339, 0.0
        %v378 = vadd.f32 %v344, 0.0
        %v379 = vadd.f32 %v347, 0.0
        %v380 = vadd.f32 %v352, 0.0
        %v381 = vadd.f32 %v355, 0.0
        %v382 = vadd.f32 %v360, 0.0
        %v383 = vadd.f32 %v363, 0.0
        %s384 = scalar_lea.vmem %s190, 12
        %v385 = vld [vmem:[%s384] sm:$0xf]
        %v386 = vld [vmem:[%s384 + $0x4] sm:$0xf]
        %v387 = vld [vmem:[%s384 + $0x8] sm:$0xf]
        %v391 = vunpack.c.l.b16 %v385
        %v392 = vunpack.c.l.b16 %v386
        %v393 = vunpack.c.l.b16 %v387
        %v394 = vpack.c.b16 %v392, %v391
        %v395 = vpack.c.b16 %v393, %v393
        %v398 = vsel %vm281, %v395, 0
        %400 = vmatprep.subr.bf16.mxu0 0
        %401 = vmatpush1.bf16.msra.mxu0 %v394
        %402 = vmatprep.subr.bf16.mxu0 0
        %403 = vmatpush1.bf16.msra.mxu0 %v398
        %404 = vmatprep.subr.bf16.mxu0 0
        %405 = vmatpush1.bf16.msra.mxu0 0
        %406 = vmatprep.subr.bf16.mxu0 0
        %407 = vmatpush1.bf16.msra.mxu0 0
        %408 = vmatprep.subr.bf16.mxu0 0
        %409 = vmatpush1.bf16.msra.mxu0 0
        %410 = vmatprep.subr.bf16.mxu0 0
        %411 = vmatpush1.bf16.msra.mxu0 0
        %412 = vmatprep.subr.bf16.mxu0 0
        %413 = vmatpush1.bf16.msra.mxu0 0
        %414 = vmatprep.subr.bf16.mxu0 0
        %415 = vmatpush1.bf16.msra.mxu0 0
        %416 = vmatprep.subr.bf16.mxu0 0
        %417 = vmatpush1.bf16.msra.mxu0 0
        %418 = vmatprep.subr.bf16.mxu0 0
        %419 = vmatpush1.bf16.msra.mxu0 0
        %420 = vmatprep.subr.bf16.mxu0 0
        %421 = vmatpush1.bf16.msra.mxu0 0
        %422 = vmatprep.subr.bf16.mxu0 0
        %423 = vmatpush1.bf16.msra.mxu0 0
        %424 = vmatprep.subr.bf16.mxu0 0
        %425 = vmatpush1.bf16.msra.mxu0 0
        %426 = vmatprep.subr.bf16.mxu0 0
        %427 = vmatpush1.bf16.msra.mxu0 0
        %428 = vmatprep.subr.bf16.mxu0 0
        %429 = vmatpush1.bf16.msra.mxu0 0
        %430 = vmatprep.subr.bf16.mxu0 0
        %431 = vmatpush1.bf16.msra.mxu0 0
        %432 = vmatprep.mubr.bf16.mxu0 0
        %433 = vmatmul.mubr.bf16.gmra.mrb[0].mxu0 %v261
        %v434 = vpop.f32.mrb[0].mxu0
        %v435 = vadd.f32 0.0, %v434
        %v436 = vpop.f32.mrb[0].mxu0
        %v437 = vpop.f32.mrb[0].mxu0
        %v438 = vadd.f32 0.0, %v437
        %v439 = vpop.f32.mrb[0].mxu0
        %440 = vmatprep.mubr.bf16.mxu0 0
        %441 = vmatmul.mubr.bf16.gmra.mrb[0].mxu0 %v264
        %v442 = vpop.f32.mrb[0].mxu0
        %v443 = vadd.f32 0.0, %v442
        %v444 = vpop.f32.mrb[0].mxu0
        %v445 = vpop.f32.mrb[0].mxu0
        %v446 = vadd.f32 0.0, %v445
        %v447 = vpop.f32.mrb[0].mxu0
        %448 = vmatprep.mubr.bf16.mxu0 0
        %449 = vmatmul.mubr.bf16.gmra.mrb[0].mxu0 %v267
        %v450 = vpop.f32.mrb[0].mxu0
        %v451 = vadd.f32 0.0, %v450
        %v452 = vpop.f32.mrb[0].mxu0
        %v453 = vpop.f32.mrb[0].mxu0
        %v454 = vadd.f32 0.0, %v453
        %v455 = vpop.f32.mrb[0].mxu0
        %456 = vmatprep.mubr.bf16.mxu0 0
        %457 = vmatmul.mubr.bf16.gmra.mrb[0].mxu0 %v270
        %v458 = vpop.f32.mrb[0].mxu0
        %v459 = vadd.f32 0.0, %v458
        %v460 = vpop.f32.mrb[0].mxu0
        %v461 = vpop.f32.mrb[0].mxu0
        %v462 = vadd.f32 0.0, %v461
        %v463 = vpop.f32.mrb[0].mxu0
        %464 = vmatprep.mubr.bf16.mxu0 0
        %465 = vmatmul.mubr.bf16.gmra.mrb[0].mxu0 %v273
        %v466 = vpop.f32.mrb[0].mxu0
        %v467 = vadd.f32 0.0, %v466
        %v468 = vpop.f32.mrb[0].mxu0
        %v469 = vpop.f32.mrb[0].mxu0
        %v470 = vadd.f32 0.0, %v469
        %v471 = vpop.f32.mrb[0].mxu0
        %472 = vmatprep.mubr.bf16.mxu0 0
        %473 = vmatmul.mubr.bf16.gmra.mrb[0].mxu0 %v276
        %v474 = vpop.f32.mrb[0].mxu0
        %v475 = vadd.f32 0.0, %v474
        %v476 = vpop.f32.mrb[0].mxu0
        %v477 = vpop.f32.mrb[0].mxu0
        %v478 = vadd.f32 0.0, %v477
        %v479 = vpop.f32.mrb[0].mxu0
        %480 = vmatprep.mubr.bf16.mxu0 0
        %481 = vmatmul.mubr.bf16.gmra.mrb[0].mxu0 %v279
        %v482 = vpop.f32.mrb[0].mxu0
        %v483 = vadd.f32 0.0, %v482
        %v484 = vpop.f32.mrb[0].mxu0
        %v485 = vpop.f32.mrb[0].mxu0
        %v486 = vpop.f32.mrb[0].mxu0
        %487 = vdwg.mxu0
        %vm501 = vcmask 1046528
        %v502 = vrot.slane %v435, 1
        %v503 = vrot.slane %v438, 1
        %v504 = vsel %vm501, %v502, %v503
        %v505 = vrot.slane %v443, 1
        %v506 = vsel %vm501, %v503, %v505
        %v507 = vrot.slane %v446, 1
        %v508 = vsel %vm501, %v505, %v507
        %v509 = vrot.slane %v451, 1
        %v510 = vsel %vm501, %v507, %v509
        %v511 = vrot.slane %v454, 1
        %v512 = vsel %vm501, %v509, %v511
        %v513 = vrot.slane %v459, 1
        %v514 = vsel %vm501, %v511, %v513
        %v515 = vrot.slane %v462, 1
        %v516 = vsel %vm501, %v513, %v515
        %v517 = vrot.slane %v467, 1
        %v518 = vsel %vm501, %v515, %v517
        %v519 = vrot.slane %v470, 1
        %v520 = vsel %vm501, %v517, %v519
        %v521 = vrot.slane %v475, 1
        %v522 = vsel %vm501, %v519, %v521
        %v523 = vrot.slane %v478, 1
        %v524 = vsel %vm501, %v521, %v523
        %v525 = vrot.slane %v483, 1
        %v526 = vsel %vm501, %v523, %v525
        %v539 = vadd.f32 %v372, %v504
        %v540 = vadd.f32 %v373, %v506
        %v541 = vadd.f32 %v374, %v508
        %v542 = vadd.f32 %v375, %v510
        %v543 = vadd.f32 %v376, %v512
        %v544 = vadd.f32 %v377, %v514
        %v545 = vadd.f32 %v378, %v516
        %v546 = vadd.f32 %v379, %v518
        %v547 = vadd.f32 %v380, %v520
        %v548 = vadd.f32 %v381, %v522
        %v549 = vadd.f32 %v382, %v524
        %v550 = vadd.f32 %v383, %v526
        %s551 = scalar_lea.vmem %s190, 24
        %v552 = vld [vmem:[%s551] sm:$0xf]
        %v553 = vld [vmem:[%s551 + $0x4] sm:$0xf]
        %v554 = vld [vmem:[%s551 + $0x8] sm:$0xf]
        %v558 = vunpack.c.l.b16 %v552
        %v559 = vunpack.c.l.b16 %v553
        %v560 = vunpack.c.l.b16 %v554
        %v561 = vpack.c.b16 %v559, %v558
        %v562 = vpack.c.b16 %v560, %v560
        %v565 = vsel %vm281, %v562, 0
        %567 = vmatprep.subr.bf16.mxu0 0
        %568 = vmatpush1.bf16.msra.mxu0 %v561
        %569 = vmatprep.subr.bf16.mxu0 0
        %570 = vmatpush1.bf16.msra.mxu0 %v565
        %571 = vmatprep.subr.bf16.mxu0 0
        %572 = vmatpush1.bf16.msra.mxu0 0
        %573 = vmatprep.subr.bf16.mxu0 0
        %574 = vmatpush1.bf16.msra.mxu0 0
        %575 = vmatprep.subr.bf16.mxu0 0
        %576 = vmatpush1.bf16.msra.mxu0 0
        %577 = vmatprep.subr.bf16.mxu0 0
        %578 = vmatpush1.bf16.msra.mxu0 0
        %579 = vmatprep.subr.bf16.mxu0 0
        %580 = vmatpush1.bf16.msra.mxu0 0
        %581 = vmatprep.subr.bf16.mxu0 0
        %582 = vmatpush1.bf16.msra.mxu0 0
        %583 = vmatprep.subr.bf16.mxu0 0
        %584 = vmatpush1.bf16.msra.mxu0 0
        %585 = vmatprep.subr.bf16.mxu0 0
        %586 = vmatpush1.bf16.msra.mxu0 0
        %587 = vmatprep.subr.bf16.mxu0 0
        %588 = vmatpush1.bf16.msra.mxu0 0
        %589 = vmatprep.subr.bf16.mxu0 0
        %590 = vmatpush1.bf16.msra.mxu0 0
        %591 = vmatprep.subr.bf16.mxu0 0
        %592 = vmatpush1.bf16.msra.mxu0 0
        %593 = vmatprep.subr.bf16.mxu0 0
        %594 = vmatpush1.bf16.msra.mxu0 0
        %595 = vmatprep.subr.bf16.mxu0 0
        %596 = vmatpush1.bf16.msra.mxu0 0
        %597 = vmatprep.subr.bf16.mxu0 0
        %598 = vmatpush1.bf16.msra.mxu0 0
        %599 = vmatprep.mubr.bf16.mxu0 0
        %600 = vmatmul.mubr.bf16.gmra.mrb[0].mxu0 %v261
        %v601 = vpop.f32.mrb[0].mxu0
        %v602 = vadd.f32 0.0, %v601
        %v603 = vpop.f32.mrb[0].mxu0
        %v604 = vpop.f32.mrb[0].mxu0
        %v605 = vadd.f32 0.0, %v604
        %v606 = vpop.f32.mrb[0].mxu0
        %607 = vmatprep.mubr.bf16.mxu0 0
        %608 = vmatmul.mubr.bf16.gmra.mrb[0].mxu0 %v264
        %v609 = vpop.f32.mrb[0].mxu0
        %v610 = vadd.f32 0.0, %v609
        %v611 = vpop.f32.mrb[0].mxu0
        %v612 = vpop.f32.mrb[0].mxu0
        %v613 = vadd.f32 0.0, %v612
        %v614 = vpop.f32.mrb[0].mxu0
        %615 = vmatprep.mubr.bf16.mxu0 0
        %616 = vmatmul.mubr.bf16.gmra.mrb[0].mxu0 %v267
        %v617 = vpop.f32.mrb[0].mxu0
        %v618 = vadd.f32 0.0, %v617
        %v619 = vpop.f32.mrb[0].mxu0
        %v620 = vpop.f32.mrb[0].mxu0
        %v621 = vadd.f32 0.0, %v620
        %v622 = vpop.f32.mrb[0].mxu0
        %623 = vmatprep.mubr.bf16.mxu0 0
        %624 = vmatmul.mubr.bf16.gmra.mrb[0].mxu0 %v270
        %v625 = vpop.f32.mrb[0].mxu0
        %v626 = vadd.f32 0.0, %v625
        %v627 = vpop.f32.mrb[0].mxu0
        %v628 = vpop.f32.mrb[0].mxu0
        %v629 = vadd.f32 0.0, %v628
        %v630 = vpop.f32.mrb[0].mxu0
        %631 = vmatprep.mubr.bf16.mxu0 0
        %632 = vmatmul.mubr.bf16.gmra.mrb[0].mxu0 %v273
        %v633 = vpop.f32.mrb[0].mxu0
        %v634 = vadd.f32 0.0, %v633
        %v635 = vpop.f32.mrb[0].mxu0
        %v636 = vpop.f32.mrb[0].mxu0
        %v637 = vadd.f32 0.0, %v636
        %v638 = vpop.f32.mrb[0].mxu0
        %639 = vmatprep.mubr.bf16.mxu0 0
        %640 = vmatmul.mubr.bf16.gmra.mrb[0].mxu0 %v276
        %v641 = vpop.f32.mrb[0].mxu0
        %v642 = vadd.f32 0.0, %v641
        %v643 = vpop.f32.mrb[0].mxu0
        %v644 = vpop.f32.mrb[0].mxu0
        %v645 = vadd.f32 0.0, %v644
        %v646 = vpop.f32.mrb[0].mxu0
        %647 = vmatprep.mubr.bf16.mxu0 0
        %648 = vmatmul.mubr.bf16.gmra.mrb[0].mxu0 %v279
        %v649 = vpop.f32.mrb[0].mxu0
        %v650 = vadd.f32 0.0, %v649
        %v651 = vpop.f32.mrb[0].mxu0
        %v652 = vpop.f32.mrb[0].mxu0
        %v653 = vpop.f32.mrb[0].mxu0
        %654 = vdwg.mxu0
        %vm668 = vcmask 1045504
        %v669 = vrot.slane %v602, 2
        %v670 = vrot.slane %v605, 2
        %v671 = vsel %vm668, %v669, %v670
        %v672 = vrot.slane %v610, 2
        %v673 = vsel %vm668, %v670, %v672
        %v674 = vrot.slane %v613, 2
        %v675 = vsel %vm668, %v672, %v674
        %v676 = vrot.slane %v618, 2
        %v677 = vsel %vm668, %v674, %v676
        %v678 = vrot.slane %v621, 2
        %v679 = vsel %vm668, %v676, %v678
        %v680 = vrot.slane %v626, 2
        %v681 = vsel %vm668, %v678, %v680
        %v682 = vrot.slane %v629, 2
        %v683 = vsel %vm668, %v680, %v682
        %v684 = vrot.slane %v634, 2
        %v685 = vsel %vm668, %v682, %v684
        %v686 = vrot.slane %v637, 2
        %v687 = vsel %vm668, %v684, %v686
        %v688 = vrot.slane %v642, 2
        %v689 = vsel %vm668, %v686, %v688
        %v690 = vrot.slane %v645, 2
        %v691 = vsel %vm668, %v688, %v690
        %v692 = vrot.slane %v650, 2
        %v693 = vsel %vm668, %v690, %v692
        %v706 = vadd.f32 %v539, %v671
        %v707 = vadd.f32 %v540, %v673
        %v708 = vadd.f32 %v541, %v675
        %v709 = vadd.f32 %v542, %v677
        %v710 = vadd.f32 %v543, %v679
        %v711 = vadd.f32 %v544, %v681
        %v712 = vadd.f32 %v545, %v683
        %v713 = vadd.f32 %v546, %v685
        %v714 = vadd.f32 %v547, %v687
        %v715 = vadd.f32 %v548, %v689
        %v716 = vadd.f32 %v549, %v691
        %v717 = vadd.f32 %v550, %v693
        %s718 = sadd.s32 %s196, 16
        %s719 = sshra.s32 %s718, 3
        %s720 = sand.u32 %s718, 7
        %s721 = smul.addr %s719, 4
        %s722 = scalar_lea.vmem %s0, %s721
        %v723 = vld [vmem:[%s722] sm:$0xf]
        %v724 = vld [vmem:[%s722 + $0x4] sm:$0xf]
        %v725 = vld [vmem:[%s722 + $0x8] sm:$0xf]
        %v726 = vld [vmem:[%s722 + $0xc] sm:$0xf]
        %v727 = vld [vmem:[%s722 + $0x10] sm:$0xf]
        %v728 = vld [vmem:[%s722 + $0x14] sm:$0xf]
        %v729 = vld [vmem:[%s722 + $0x18] sm:$0xf]
        %v730 = vld [vmem:[%s722 + $0x1c] sm:$0xf]
        %v731 = vld [vmem:[%s722 + $0x20] sm:$0xf]
        %v732 = vld [vmem:[%s722 + $0x24] sm:$0xf]
        %v733 = vld [vmem:[%s722 + $0x28] sm:$0xf]
        %v734 = vld [vmem:[%s722 + $0x2c] sm:$0xf]
        %v735 = vld [vmem:[%s722 + $0x30] sm:$0xf]
        %s736 = scalar_lea.vmem %s190, 36
        %v737 = vld [vmem:[%s736] sm:$0xf]
        %v738 = vld [vmem:[%s736 + $0x4] sm:$0xf]
        %v739 = vld [vmem:[%s736 + $0x8] sm:$0xf]
        %v753 = vunpack.c.l.b16 %v723
        %v754 = vunpack.c.l.b16 %v724
        %v755 = vunpack.c.l.b16 %v725
        %v756 = vunpack.c.l.b16 %v726
        %v757 = vunpack.c.l.b16 %v727
        %v758 = vunpack.c.l.b16 %v728
        %v759 = vunpack.c.l.b16 %v729
        %v760 = vunpack.c.l.b16 %v730
        %v761 = vunpack.c.l.b16 %v731
        %v762 = vunpack.c.l.b16 %v732
        %v763 = vunpack.c.l.b16 %v733
        %v764 = vunpack.c.l.b16 %v734
        %v765 = vunpack.c.l.b16 %v735
        %v766 = vpack.c.b16 %v754, %v753
        %v767 = vpack.c.b16 %v756, %v755
        %v768 = vpack.c.b16 %v758, %v757
        %v769 = vpack.c.b16 %v760, %v759
        %v770 = vpack.c.b16 %v762, %v761
        %v771 = vpack.c.b16 %v764, %v763
        %v772 = vpack.c.b16 %v765, %v765
        %v776 = vunpack.c.l.b16 %v737
        %v777 = vunpack.c.l.b16 %v738
        %v778 = vunpack.c.l.b16 %v739
        %v779 = vpack.c.b16 %v777, %v776
        %v780 = vpack.c.b16 %v778, %v778
        %v783 = vsel %vm259, %v766, 0
        %v786 = vsel %vm259, %v767, 0
        %v789 = vsel %vm259, %v768, 0
        %v792 = vsel %vm259, %v769, 0
        %v795 = vsel %vm259, %v770, 0
        %v798 = vsel %vm259, %v771, 0
        %v801 = vsel %vm259, %v772, 0
        %v804 = vsel %vm281, %v780, 0
        %806 = vmatprep.subr.bf16.mxu0 0
        %807 = vmatpush1.bf16.msra.mxu0 %v779
        %808 = vmatprep.subr.bf16.mxu0 0
        %809 = vmatpush1.bf16.msra.mxu0 %v804
        %810 = vmatprep.subr.bf16.mxu0 0
        %811 = vmatpush1.bf16.msra.mxu0 0
        %812 = vmatprep.subr.bf16.mxu0 0
        %813 = vmatpush1.bf16.msra.mxu0 0
        %814 = vmatprep.subr.bf16.mxu0 0
        %815 = vmatpush1.bf16.msra.mxu0 0
        %816 = vmatprep.subr.bf16.mxu0 0
        %817 = vmatpush1.bf16.msra.mxu0 0
        %818 = vmatprep.subr.bf16.mxu0 0
        %819 = vmatpush1.bf16.msra.mxu0 0
        %820 = vmatprep.subr.bf16.mxu0 0
        %821 = vmatpush1.bf16.msra.mxu0 0
        %822 = vmatprep.subr.bf16.mxu0 0
        %823 = vmatpush1.bf16.msra.mxu0 0
        %824 = vmatprep.subr.bf16.mxu0 0
        %825 = vmatpush1.bf16.msra.mxu0 0
        %826 = vmatprep.subr.bf16.mxu0 0
        %827 = vmatpush1.bf16.msra.mxu0 0
        %828 = vmatprep.subr.bf16.mxu0 0
        %829 = vmatpush1.bf16.msra.mxu0 0
        %830 = vmatprep.subr.bf16.mxu0 0
        %831 = vmatpush1.bf16.msra.mxu0 0
        %832 = vmatprep.subr.bf16.mxu0 0
        %833 = vmatpush1.bf16.msra.mxu0 0
        %834 = vmatprep.subr.bf16.mxu0 0
        %835 = vmatpush1.bf16.msra.mxu0 0
        %836 = vmatprep.subr.bf16.mxu0 0
        %837 = vmatpush1.bf16.msra.mxu0 0
        %838 = vmatprep.mubr.bf16.mxu0 0
        %839 = vmatmul.mubr.bf16.gmra.mrb[0].mxu0 %v783
        %v840 = vpop.f32.mrb[0].mxu0
        %v841 = vadd.f32 0.0, %v840
        %v842 = vpop.f32.mrb[0].mxu0
        %v843 = vpop.f32.mrb[0].mxu0
        %v844 = vadd.f32 0.0, %v843
        %v845 = vpop.f32.mrb[0].mxu0
        %846 = vmatprep.mubr.bf16.mxu0 0
        %847 = vmatmul.mubr.bf16.gmra.mrb[0].mxu0 %v786
        %v848 = vpop.f32.mrb[0].mxu0
        %v849 = vadd.f32 0.0, %v848
        %v850 = vpop.f32.mrb[0].mxu0
        %v851 = vpop.f32.mrb[0].mxu0
        %v852 = vadd.f32 0.0, %v851
        %v853 = vpop.f32.mrb[0].mxu0
        %854 = vmatprep.mubr.bf16.mxu0 0
        %855 = vmatmul.mubr.bf16.gmra.mrb[0].mxu0 %v789
        %v856 = vpop.f32.mrb[0].mxu0
        %v857 = vadd.f32 0.0, %v856
        %v858 = vpop.f32.mrb[0].mxu0
        %v859 = vpop.f32.mrb[0].mxu0
        %v860 = vadd.f32 0.0, %v859
        %v861 = vpop.f32.mrb[0].mxu0
        %862 = vmatprep.mubr.bf16.mxu0 0
        %863 = vmatmul.mubr.bf16.gmra.mrb[0].mxu0 %v792
        %v864 = vpop.f32.mrb[0].mxu0
        %v865 = vadd.f32 0.0, %v864
        %v866 = vpop.f32.mrb[0].mxu0
        %v867 = vpop.f32.mrb[0].mxu0
        %v868 = vadd.f32 0.0, %v867
        %v869 = vpop.f32.mrb[0].mxu0
        %870 = vmatprep.mubr.bf16.mxu0 0
        %871 = vmatmul.mubr.bf16.gmra.mrb[0].mxu0 %v795
        %v872 = vpop.f32.mrb[0].mxu0
        %v873 = vadd.f32 0.0, %v872
        %v874 = vpop.f32.mrb[0].mxu0
        %v875 = vpop.f32.mrb[0].mxu0
        %v876 = vadd.f32 0.0, %v875
        %v877 = vpop.f32.mrb[0].mxu0
        %878 = vmatprep.mubr.bf16.mxu0 0
        %879 = vmatmul.mubr.bf16.gmra.mrb[0].mxu0 %v798
        %v880 = vpop.f32.mrb[0].mxu0
        %v881 = vadd.f32 0.0, %v880
        %v882 = vpop.f32.mrb[0].mxu0
        %v883 = vpop.f32.mrb[0].mxu0
        %v884 = vadd.f32 0.0, %v883
        %v885 = vpop.f32.mrb[0].mxu0
        %886 = vmatprep.mubr.bf16.mxu0 0
        %887 = vmatmul.mubr.bf16.gmra.mrb[0].mxu0 %v801
        %v888 = vpop.f32.mrb[0].mxu0
        %v889 = vpop.f32.mrb[0].mxu0
        %v890 = vpop.f32.mrb[0].mxu0
        %v891 = vpop.f32.mrb[0].mxu0
        %892 = vdwg.mxu0
        %v893 = vadd.f32 %v706, %v841
        %v894 = vadd.f32 %v707, %v844
        %v895 = vadd.f32 %v708, %v849
        %v896 = vadd.f32 %v709, %v852
        %v897 = vadd.f32 %v710, %v857
        %v898 = vadd.f32 %v711, %v860
        %v899 = vadd.f32 %v712, %v865
        %v900 = vadd.f32 %v713, %v868
        %v901 = vadd.f32 %v714, %v873
        %v902 = vadd.f32 %v715, %v876
        %v903 = vadd.f32 %v716, %v881
        %v904 = vadd.f32 %v717, %v884
        %s905 = scalar_lea.vmem %s190, 48
        %v906 = vld [vmem:[%s905] sm:$0xf]
        %v907 = vld [vmem:[%s905 + $0x4] sm:$0xf]
        %v908 = vld [vmem:[%s905 + $0x8] sm:$0xf]
        %v912 = vunpack.c.l.b16 %v906
        %v913 = vunpack.c.l.b16 %v907
        %v914 = vunpack.c.l.b16 %v908
        %v915 = vpack.c.b16 %v913, %v912
        %v916 = vpack.c.b16 %v914, %v914
        %v919 = vsel %vm281, %v916, 0
        %921 = vmatprep.subr.bf16.mxu0 0
        %922 = vmatpush1.bf16.msra.mxu0 %v915
        %923 = vmatprep.subr.bf16.mxu0 0
        %924 = vmatpush1.bf16.msra.mxu0 %v919
        %925 = vmatprep.subr.bf16.mxu0 0
        %926 = vmatpush1.bf16.msra.mxu0 0
        %927 = vmatprep.subr.bf16.mxu0 0
        %928 = vmatpush1.bf16.msra.mxu0 0
        %929 = vmatprep.subr.bf16.mxu0 0
        %930 = vmatpush1.bf16.msra.mxu0 0
        %931 = vmatprep.subr.bf16.mxu0 0
        %932 = vmatpush1.bf16.msra.mxu0 0
        %933 = vmatprep.subr.bf16.mxu0 0
        %934 = vmatpush1.bf16.msra.mxu0 0
        %935 = vmatprep.subr.bf16.mxu0 0
        %936 = vmatpush1.bf16.msra.mxu0 0
        %937 = vmatprep.subr.bf16.mxu0 0
        %938 = vmatpush1.bf16.msra.mxu0 0
        %939 = vmatprep.subr.bf16.mxu0 0
        %940 = vmatpush1.bf16.msra.mxu0 0
        %941 = vmatprep.subr.bf16.mxu0 0
        %942 = vmatpush1.bf16.msra.mxu0 0
        %943 = vmatprep.subr.bf16.mxu0 0
        %944 = vmatpush1.bf16.msra.mxu0 0
        %945 = vmatprep.subr.bf16.mxu0 0
        %946 = vmatpush1.bf16.msra.mxu0 0
        %947 = vmatprep.subr.bf16.mxu0 0
        %948 = vmatpush1.bf16.msra.mxu0 0
        %949 = vmatprep.subr.bf16.mxu0 0
        %950 = vmatpush1.bf16.msra.mxu0 0
        %951 = vmatprep.subr.bf16.mxu0 0
        %952 = vmatpush1.bf16.msra.mxu0 0
        %953 = vmatprep.mubr.bf16.mxu0 0
        %954 = vmatmul.mubr.bf16.gmra.mrb[0].mxu0 %v783
        %v955 = vpop.f32.mrb[0].mxu0
        %v956 = vadd.f32 0.0, %v955
        %v957 = vpop.f32.mrb[0].mxu0
        %v958 = vpop.f32.mrb[0].mxu0
        %v959 = vadd.f32 0.0, %v958
        %v960 = vpop.f32.mrb[0].mxu0
        %961 = vmatprep.mubr.bf16.mxu0 0
        %962 = vmatmul.mubr.bf16.gmra.mrb[0].mxu0 %v786
        %v963 = vpop.f32.mrb[0].mxu0
        %v964 = vadd.f32 0.0, %v963
        %v965 = vpop.f32.mrb[0].mxu0
        %v966 = vpop.f32.mrb[0].mxu0
        %v967 = vadd.f32 0.0, %v966
        %v968 = vpop.f32.mrb[0].mxu0
        %969 = vmatprep.mubr.bf16.mxu0 0
        %970 = vmatmul.mubr.bf16.gmra.mrb[0].mxu0 %v789
        %v971 = vpop.f32.mrb[0].mxu0
        %v972 = vadd.f32 0.0, %v971
        %v973 = vpop.f32.mrb[0].mxu0
        %v974 = vpop.f32.mrb[0].mxu0
        %v975 = vadd.f32 0.0, %v974
        %v976 = vpop.f32.mrb[0].mxu0
        %977 = vmatprep.mubr.bf16.mxu0 0
        %978 = vmatmul.mubr.bf16.gmra.mrb[0].mxu0 %v792
        %v979 = vpop.f32.mrb[0].mxu0
        %v980 = vadd.f32 0.0, %v979
        %v981 = vpop.f32.mrb[0].mxu0
        %v982 = vpop.f32.mrb[0].mxu0
        %v983 = vadd.f32 0.0, %v982
        %v984 = vpop.f32.mrb[0].mxu0
        %985 = vmatprep.mubr.bf16.mxu0 0
        %986 = vmatmul.mubr.bf16.gmra.mrb[0].mxu0 %v795
        %v987 = vpop.f32.mrb[0].mxu0
        %v988 = vadd.f32 0.0, %v987
        %v989 = vpop.f32.mrb[0].mxu0
        %v990 = vpop.f32.mrb[0].mxu0
        %v991 = vadd.f32 0.0, %v990
        %v992 = vpop.f32.mrb[0].mxu0
        %993 = vmatprep.mubr.bf16.mxu0 0
        %994 = vmatmul.mubr.bf16.gmra.mrb[0].mxu0 %v798
        %v995 = vpop.f32.mrb[0].mxu0
        %v996 = vadd.f32 0.0, %v995
        %v997 = vpop.f32.mrb[0].mxu0
        %v998 = vpop.f32.mrb[0].mxu0
        %v999 = vadd.f32 0.0, %v998
        %v1000 = vpop.f32.mrb[0].mxu0
        %1001 = vmatprep.mubr.bf16.mxu0 0
        %1002 = vmatmul.mubr.bf16.gmra.mrb[0].mxu0 %v801
        %v1003 = vpop.f32.mrb[0].mxu0
        %v1004 = vadd.f32 0.0, %v1003
        %v1005 = vpop.f32.mrb[0].mxu0
        %v1006 = vpop.f32.mrb[0].mxu0
        %v1007 = vpop.f32.mrb[0].mxu0
        %1008 = vdwg.mxu0
        %v1022 = vrot.slane %v956, 1
        %v1023 = vrot.slane %v959, 1
        %v1024 = vsel %vm501, %v1022, %v1023
        %v1025 = vrot.slane %v964, 1
        %v1026 = vsel %vm501, %v1023, %v1025
        %v1027 = vrot.slane %v967, 1
        %v1028 = vsel %vm501, %v1025, %v1027
        %v1029 = vrot.slane %v972, 1
        %v1030 = vsel %vm501, %v1027, %v1029
        %v1031 = vrot.slane %v975, 1
        %v1032 = vsel %vm501, %v1029, %v1031
        %v1033 = vrot.slane %v980, 1
        %v1034 = vsel %vm501, %v1031, %v1033
        %v1035 = vrot.slane %v983, 1
        %v1036 = vsel %vm501, %v1033, %v1035
        %v1037 = vrot.slane %v988, 1
        %v1038 = vsel %vm501, %v1035, %v1037
        %v1039 = vrot.slane %v991, 1
        %v1040 = vsel %vm501, %v1037, %v1039
        %v1041 = vrot.slane %v996, 1
        %v1042 = vsel %vm501, %v1039, %v1041
        %v1043 = vrot.slane %v999, 1
        %v1044 = vsel %vm501, %v1041, %v1043
        %v1045 = vrot.slane %v1004, 1
        %v1046 = vsel %vm501, %v1043, %v1045
        %v1059 = vadd.f32 %v893, %v1024
        %v1060 = vadd.f32 %v894, %v1026
        %v1061 = vadd.f32 %v895, %v1028
        %v1062 = vadd.f32 %v896, %v1030
        %v1063 = vadd.f32 %v897, %v1032
        %v1064 = vadd.f32 %v898, %v1034
        %v1065 = vadd.f32 %v899, %v1036
        %v1066 = vadd.f32 %v900, %v1038
        %v1067 = vadd.f32 %v901, %v1040
        %v1068 = vadd.f32 %v902, %v1042
        %v1069 = vadd.f32 %v903, %v1044
        %v1070 = vadd.f32 %v904, %v1046
        %s1071 = scalar_lea.vmem %s190, 60
        %v1072 = vld [vmem:[%s1071] sm:$0xf]
        %v1073 = vld [vmem:[%s1071 + $0x4] sm:$0xf]
        %v1074 = vld [vmem:[%s1071 + $0x8] sm:$0xf]
        %v1078 = vunpack.c.l.b16 %v1072
        %v1079 = vunpack.c.l.b16 %v1073
        %v1080 = vunpack.c.l.b16 %v1074
        %v1081 = vpack.c.b16 %v1079, %v1078
        %v1082 = vpack.c.b16 %v1080, %v1080
        %v1085 = vsel %vm281, %v1082, 0
        %1087 = vmatprep.subr.bf16.mxu0 0
        %1088 = vmatpush1.bf16.msra.mxu0 %v1081
        %1089 = vmatprep.subr.bf16.mxu0 0
        %1090 = vmatpush1.bf16.msra.mxu0 %v1085
        %1091 = vmatprep.subr.bf16.mxu0 0
        %1092 = vmatpush1.bf16.msra.mxu0 0
        %1093 = vmatprep.subr.bf16.mxu0 0
        %1094 = vmatpush1.bf16.msra.mxu0 0
        %1095 = vmatprep.subr.bf16.mxu0 0
        %1096 = vmatpush1.bf16.msra.mxu0 0
        %1097 = vmatprep.subr.bf16.mxu0 0
        %1098 = vmatpush1.bf16.msra.mxu0 0
        %1099 = vmatprep.subr.bf16.mxu0 0
        %1100 = vmatpush1.bf16.msra.mxu0 0
        %1101 = vmatprep.subr.bf16.mxu0 0
        %1102 = vmatpush1.bf16.msra.mxu0 0
        %1103 = vmatprep.subr.bf16.mxu0 0
        %1104 = vmatpush1.bf16.msra.mxu0 0
        %1105 = vmatprep.subr.bf16.mxu0 0
        %1106 = vmatpush1.bf16.msra.mxu0 0
        %1107 = vmatprep.subr.bf16.mxu0 0
        %1108 = vmatpush1.bf16.msra.mxu0 0
        %1109 = vmatprep.subr.bf16.mxu0 0
        %1110 = vmatpush1.bf16.msra.mxu0 0
        %1111 = vmatprep.subr.bf16.mxu0 0
        %1112 = vmatpush1.bf16.msra.mxu0 0
        %1113 = vmatprep.subr.bf16.mxu0 0
        %1114 = vmatpush1.bf16.msra.mxu0 0
        %1115 = vmatprep.subr.bf16.mxu0 0
        %1116 = vmatpush1.bf16.msra.mxu0 0
        %1117 = vmatprep.subr.bf16.mxu0 0
        %1118 = vmatpush1.bf16.msra.mxu0 0
        %1119 = vmatprep.mubr.bf16.mxu0 0
        %1120 = vmatmul.mubr.bf16.gmra.mrb[0].mxu0 %v783
        %v1121 = vpop.f32.mrb[0].mxu0
        %v1122 = vadd.f32 0.0, %v1121
        %v1123 = vpop.f32.mrb[0].mxu0
        %v1124 = vpop.f32.mrb[0].mxu0
        %v1125 = vadd.f32 0.0, %v1124
        %v1126 = vpop.f32.mrb[0].mxu0
        %1127 = vmatprep.mubr.bf16.mxu0 0
        %1128 = vmatmul.mubr.bf16.gmra.mrb[0].mxu0 %v786
        %v1129 = vpop.f32.mrb[0].mxu0
        %v1130 = vadd.f32 0.0, %v1129
        %v1131 = vpop.f32.mrb[0].mxu0
        %v1132 = vpop.f32.mrb[0].mxu0
        %v1133 = vadd.f32 0.0, %v1132
        %v1134 = vpop.f32.mrb[0].mxu0
        %1135 = vmatprep.mubr.bf16.mxu0 0
        %1136 = vmatmul.mubr.bf16.gmra.mrb[0].mxu0 %v789
        %v1137 = vpop.f32.mrb[0].mxu0
        %v1138 = vadd.f32 0.0, %v1137
        %v1139 = vpop.f32.mrb[0].mxu0
        %v1140 = vpop.f32.mrb[0].mxu0
        %v1141 = vadd.f32 0.0, %v1140
        %v1142 = vpop.f32.mrb[0].mxu0
        %1143 = vmatprep.mubr.bf16.mxu0 0
        %1144 = vmatmul.mubr.bf16.gmra.mrb[0].mxu0 %v792
        %v1145 = vpop.f32.mrb[0].mxu0
        %v1146 = vadd.f32 0.0, %v1145
        %v1147 = vpop.f32.mrb[0].mxu0
        %v1148 = vpop.f32.mrb[0].mxu0
        %v1149 = vadd.f32 0.0, %v1148
        %v1150 = vpop.f32.mrb[0].mxu0
        %1151 = vmatprep.mubr.bf16.mxu0 0
        %1152 = vmatmul.mubr.bf16.gmra.mrb[0].mxu0 %v795
        %v1153 = vpop.f32.mrb[0].mxu0
        %v1154 = vadd.f32 0.0, %v1153
        %v1155 = vpop.f32.mrb[0].mxu0
        %v1156 = vpop.f32.mrb[0].mxu0
        %v1157 = vadd.f32 0.0, %v1156
        %v1158 = vpop.f32.mrb[0].mxu0
        %1159 = vmatprep.mubr.bf16.mxu0 0
        %1160 = vmatmul.mubr.bf16.gmra.mrb[0].mxu0 %v798
        %v1161 = vpop.f32.mrb[0].mxu0
        %v1162 = vadd.f32 0.0, %v1161
        %v1163 = vpop.f32.mrb[0].mxu0
        %v1164 = vpop.f32.mrb[0].mxu0
        %v1165 = vadd.f32 0.0, %v1164
        %v1166 = vpop.f32.mrb[0].mxu0
        %1167 = vmatprep.mubr.bf16.mxu0 0
        %1168 = vmatmul.mubr.bf16.gmra.mrb[0].mxu0 %v801
        %v1169 = vpop.f32.mrb[0].mxu0
        %v1170 = vadd.f32 0.0, %v1169
        %v1171 = vpop.f32.mrb[0].mxu0
        %v1172 = vpop.f32.mrb[0].mxu0
        %v1173 = vpop.f32.mrb[0].mxu0
        %1174 = vdwg.mxu0
        %v1188 = vrot.slane %v1122, 2
        %v1189 = vrot.slane %v1125, 2
        %v1190 = vsel %vm668, %v1188, %v1189
        %v1191 = vrot.slane %v1130, 2
        %v1192 = vsel %vm668, %v1189, %v1191
        %v1193 = vrot.slane %v1133, 2
        %v1194 = vsel %vm668, %v1191, %v1193
        %v1195 = vrot.slane %v1138, 2
        %v1196 = vsel %vm668, %v1193, %v1195
        %v1197 = vrot.slane %v1141, 2
        %v1198 = vsel %vm668, %v1195, %v1197
        %v1199 = vrot.slane %v1146, 2
        %v1200 = vsel %vm668, %v1197, %v1199
        %v1201 = vrot.slane %v1149, 2
        %v1202 = vsel %vm668, %v1199, %v1201
        %v1203 = vrot.slane %v1154, 2
        %v1204 = vsel %vm668, %v1201, %v1203
        %v1205 = vrot.slane %v1157, 2
        %v1206 = vsel %vm668, %v1203, %v1205
        %v1207 = vrot.slane %v1162, 2
        %v1208 = vsel %vm668, %v1205, %v1207
        %v1209 = vrot.slane %v1165, 2
        %v1210 = vsel %vm668, %v1207, %v1209
        %v1211 = vrot.slane %v1170, 2
        %v1212 = vsel %vm668, %v1209, %v1211
        %v1225 = vadd.f32 %v1059, %v1190
        %v1226 = vadd.f32 %v1060, %v1192
        %v1227 = vadd.f32 %v1061, %v1194
        %v1228 = vadd.f32 %v1062, %v1196
        %v1229 = vadd.f32 %v1063, %v1198
        %v1230 = vadd.f32 %v1064, %v1200
        %v1231 = vadd.f32 %v1065, %v1202
        %v1232 = vadd.f32 %v1066, %v1204
        %v1233 = vadd.f32 %v1067, %v1206
        %v1234 = vadd.f32 %v1068, %v1208
        %v1235 = vadd.f32 %v1069, %v1210
        %v1236 = vadd.f32 %v1070, %v1212
        %s1237 = sadd.s32 %s196, 32
        %s1238 = sshra.s32 %s1237, 3
        %s1239 = sand.u32 %s1237, 7
        %s1240 = smul.addr %s1238, 4
        %s1241 = scalar_lea.vmem %s0, %s1240
        %v1242 = vld [vmem:[%s1241] sm:$0xf]
        %v1243 = vld [vmem:[%s1241 + $0x4] sm:$0xf]
        %v1244 = vld [vmem:[%s1241 + $0x8] sm:$0xf]
        %v1245 = vld [vmem:[%s1241 + $0xc] sm:$0xf]
        %v1246 = vld [vmem:[%s1241 + $0x10] sm:$0xf]
        %v1247 = vld [vmem:[%s1241 + $0x14] sm:$0xf]
        %v1248 = vld [vmem:[%s1241 + $0x18] sm:$0xf]
        %v1249 = vld [vmem:[%s1241 + $0x1c] sm:$0xf]
        %v1250 = vld [vmem:[%s1241 + $0x20] sm:$0xf]
        %v1251 = vld [vmem:[%s1241 + $0x24] sm:$0xf]
        %v1252 = vld [vmem:[%s1241 + $0x28] sm:$0xf]
        %v1253 = vld [vmem:[%s1241 + $0x2c] sm:$0xf]
        %v1254 = vld [vmem:[%s1241 + $0x30] sm:$0xf]
        %s1255 = scalar_lea.vmem %s190, 72
        %v1256 = vld [vmem:[%s1255] sm:$0xf]
        %v1257 = vld [vmem:[%s1255 + $0x4] sm:$0xf]
        %v1258 = vld [vmem:[%s1255 + $0x8] sm:$0xf]
        %v1272 = vunpack.c.l.b16 %v1242
        %v1273 = vunpack.c.l.b16 %v1243
        %v1274 = vunpack.c.l.b16 %v1244
        %v1275 = vunpack.c.l.b16 %v1245
        %v1276 = vunpack.c.l.b16 %v1246
        %v1277 = vunpack.c.l.b16 %v1247
        %v1278 = vunpack.c.l.b16 %v1248
        %v1279 = vunpack.c.l.b16 %v1249
        %v1280 = vunpack.c.l.b16 %v1250
        %v1281 = vunpack.c.l.b16 %v1251
        %v1282 = vunpack.c.l.b16 %v1252
        %v1283 = vunpack.c.l.b16 %v1253
        %v1284 = vunpack.c.l.b16 %v1254
        %v1285 = vpack.c.b16 %v1273, %v1272
        %v1286 = vpack.c.b16 %v1275, %v1274
        %v1287 = vpack.c.b16 %v1277, %v1276
        %v1288 = vpack.c.b16 %v1279, %v1278
        %v1289 = vpack.c.b16 %v1281, %v1280
        %v1290 = vpack.c.b16 %v1283, %v1282
        %v1291 = vpack.c.b16 %v1284, %v1284
        %v1295 = vunpack.c.l.b16 %v1256
        %v1296 = vunpack.c.l.b16 %v1257
        %v1297 = vunpack.c.l.b16 %v1258
        %v1298 = vpack.c.b16 %v1296, %v1295
        %v1299 = vpack.c.b16 %v1297, %v1297
        %v1302 = vsel %vm259, %v1285, 0
        %v1305 = vsel %vm259, %v1286, 0
        %v1308 = vsel %vm259, %v1287, 0
        %v1311 = vsel %vm259, %v1288, 0
        %v1314 = vsel %vm259, %v1289, 0
        %v1317 = vsel %vm259, %v1290, 0
        %v1320 = vsel %vm259, %v1291, 0
        %v1323 = vsel %vm281, %v1299, 0
        %1325 = vmatprep.subr.bf16.mxu0 0
        %1326 = vmatpush1.bf16.msra.mxu0 %v1298
        %1327 = vmatprep.subr.bf16.mxu0 0
        %1328 = vmatpush1.bf16.msra.mxu0 %v1323
        %1329 = vmatprep.subr.bf16.mxu0 0
        %1330 = vmatpush1.bf16.msra.mxu0 0
        %1331 = vmatprep.subr.bf16.mxu0 0
        %1332 = vmatpush1.bf16.msra.mxu0 0
        %1333 = vmatprep.subr.bf16.mxu0 0
        %1334 = vmatpush1.bf16.msra.mxu0 0
        %1335 = vmatprep.subr.bf16.mxu0 0
        %1336 = vmatpush1.bf16.msra.mxu0 0
        %1337 = vmatprep.subr.bf16.mxu0 0
        %1338 = vmatpush1.bf16.msra.mxu0 0
        %1339 = vmatprep.subr.bf16.mxu0 0
        %1340 = vmatpush1.bf16.msra.mxu0 0
        %1341 = vmatprep.subr.bf16.mxu0 0
        %1342 = vmatpush1.bf16.msra.mxu0 0
        %1343 = vmatprep.subr.bf16.mxu0 0
        %1344 = vmatpush1.bf16.msra.mxu0 0
        %1345 = vmatprep.subr.bf16.mxu0 0
        %1346 = vmatpush1.bf16.msra.mxu0 0
        %1347 = vmatprep.subr.bf16.mxu0 0
        %1348 = vmatpush1.bf16.msra.mxu0 0
        %1349 = vmatprep.subr.bf16.mxu0 0
        %1350 = vmatpush1.bf16.msra.mxu0 0
        %1351 = vmatprep.subr.bf16.mxu0 0
        %1352 = vmatpush1.bf16.msra.mxu0 0
        %1353 = vmatprep.subr.bf16.mxu0 0
        %1354 = vmatpush1.bf16.msra.mxu0 0
        %1355 = vmatprep.subr.bf16.mxu0 0
        %1356 = vmatpush1.bf16.msra.mxu0 0
        %1357 = vmatprep.mubr.bf16.mxu0 0
        %1358 = vmatmul.mubr.bf16.gmra.mrb[0].mxu0 %v1302
        %v1359 = vpop.f32.mrb[0].mxu0
        %v1360 = vadd.f32 0.0, %v1359
        %v1361 = vpop.f32.mrb[0].mxu0
        %v1362 = vpop.f32.mrb[0].mxu0
        %v1363 = vadd.f32 0.0, %v1362
        %v1364 = vpop.f32.mrb[0].mxu0
        %1365 = vmatprep.mubr.bf16.mxu0 0
        %1366 = vmatmul.mubr.bf16.gmra.mrb[0].mxu0 %v1305
        %v1367 = vpop.f32.mrb[0].mxu0
        %v1368 = vadd.f32 0.0, %v1367
        %v1369 = vpop.f32.mrb[0].mxu0
        %v1370 = vpop.f32.mrb[0].mxu0
        %v1371 = vadd.f32 0.0, %v1370
        %v1372 = vpop.f32.mrb[0].mxu0
        %1373 = vmatprep.mubr.bf16.mxu0 0
        %1374 = vmatmul.mubr.bf16.gmra.mrb[0].mxu0 %v1308
        %v1375 = vpop.f32.mrb[0].mxu0
        %v1376 = vadd.f32 0.0, %v1375
        %v1377 = vpop.f32.mrb[0].mxu0
        %v1378 = vpop.f32.mrb[0].mxu0
        %v1379 = vadd.f32 0.0, %v1378
        %v1380 = vpop.f32.mrb[0].mxu0
        %1381 = vmatprep.mubr.bf16.mxu0 0
        %1382 = vmatmul.mubr.bf16.gmra.mrb[0].mxu0 %v1311
        %v1383 = vpop.f32.mrb[0].mxu0
        %v1384 = vadd.f32 0.0, %v1383
        %v1385 = vpop.f32.mrb[0].mxu0
        %v1386 = vpop.f32.mrb[0].mxu0
        %v1387 = vadd.f32 0.0, %v1386
        %v1388 = vpop.f32.mrb[0].mxu0
        %1389 = vmatprep.mubr.bf16.mxu0 0
        %1390 = vmatmul.mubr.bf16.gmra.mrb[0].mxu0 %v1314
        %v1391 = vpop.f32.mrb[0].mxu0
        %v1392 = vadd.f32 0.0, %v1391
        %v1393 = vpop.f32.mrb[0].mxu0
        %v1394 = vpop.f32.mrb[0].mxu0
        %v1395 = vadd.f32 0.0, %v1394
        %v1396 = vpop.f32.mrb[0].mxu0
        %1397 = vmatprep.mubr.bf16.mxu0 0
        %1398 = vmatmul.mubr.bf16.gmra.mrb[0].mxu0 %v1317
        %v1399 = vpop.f32.mrb[0].mxu0
        %v1400 = vadd.f32 0.0, %v1399
        %v1401 = vpop.f32.mrb[0].mxu0
        %v1402 = vpop.f32.mrb[0].mxu0
        %v1403 = vadd.f32 0.0, %v1402
        %v1404 = vpop.f32.mrb[0].mxu0
        %1405 = vmatprep.mubr.bf16.mxu0 0
        %1406 = vmatmul.mubr.bf16.gmra.mrb[0].mxu0 %v1320
        %v1407 = vpop.f32.mrb[0].mxu0
        %v1408 = vpop.f32.mrb[0].mxu0
        %v1409 = vpop.f32.mrb[0].mxu0
        %v1410 = vpop.f32.mrb[0].mxu0
        %1411 = vdwg.mxu0
        %v1412 = vadd.f32 %v1225, %v1360
        %v1413 = vadd.f32 %v1226, %v1363
        %v1414 = vadd.f32 %v1227, %v1368
        %v1415 = vadd.f32 %v1228, %v1371
        %v1416 = vadd.f32 %v1229, %v1376
        %v1417 = vadd.f32 %v1230, %v1379
        %v1418 = vadd.f32 %v1231, %v1384
        %v1419 = vadd.f32 %v1232, %v1387
        %v1420 = vadd.f32 %v1233, %v1392
        %v1421 = vadd.f32 %v1234, %v1395
        %v1422 = vadd.f32 %v1235, %v1400
        %v1423 = vadd.f32 %v1236, %v1403
        %s1424 = scalar_lea.vmem %s190, 84
        %v1425 = vld [vmem:[%s1424] sm:$0xf]
        %v1426 = vld [vmem:[%s1424 + $0x4] sm:$0xf]
        %v1427 = vld [vmem:[%s1424 + $0x8] sm:$0xf]
        %v1431 = vunpack.c.l.b16 %v1425
        %v1432 = vunpack.c.l.b16 %v1426
        %v1433 = vunpack.c.l.b16 %v1427
        %v1434 = vpack.c.b16 %v1432, %v1431
        %v1435 = vpack.c.b16 %v1433, %v1433
        %v1438 = vsel %vm281, %v1435, 0
        %1440 = vmatprep.subr.bf16.mxu0 0
        %1441 = vmatpush1.bf16.msra.mxu0 %v1434
        %1442 = vmatprep.subr.bf16.mxu0 0
        %1443 = vmatpush1.bf16.msra.mxu0 %v1438
        %1444 = vmatprep.subr.bf16.mxu0 0
        %1445 = vmatpush1.bf16.msra.mxu0 0
        %1446 = vmatprep.subr.bf16.mxu0 0
        %1447 = vmatpush1.bf16.msra.mxu0 0
        %1448 = vmatprep.subr.bf16.mxu0 0
        %1449 = vmatpush1.bf16.msra.mxu0 0
        %1450 = vmatprep.subr.bf16.mxu0 0
        %1451 = vmatpush1.bf16.msra.mxu0 0
        %1452 = vmatprep.subr.bf16.mxu0 0
        %1453 = vmatpush1.bf16.msra.mxu0 0
        %1454 = vmatprep.subr.bf16.mxu0 0
        %1455 = vmatpush1.bf16.msra.mxu0 0
        %1456 = vmatprep.subr.bf16.mxu0 0
        %1457 = vmatpush1.bf16.msra.mxu0 0
        %1458 = vmatprep.subr.bf16.mxu0 0
        %1459 = vmatpush1.bf16.msra.mxu0 0
        %1460 = vmatprep.subr.bf16.mxu0 0
        %1461 = vmatpush1.bf16.msra.mxu0 0
        %1462 = vmatprep.subr.bf16.mxu0 0
        %1463 = vmatpush1.bf16.msra.mxu0 0
        %1464 = vmatprep.subr.bf16.mxu0 0
        %1465 = vmatpush1.bf16.msra.mxu0 0
        %1466 = vmatprep.subr.bf16.mxu0 0
        %1467 = vmatpush1.bf16.msra.mxu0 0
        %1468 = vmatprep.subr.bf16.mxu0 0
        %1469 = vmatpush1.bf16.msra.mxu0 0
        %1470 = vmatprep.subr.bf16.mxu0 0
        %1471 = vmatpush1.bf16.msra.mxu0 0
        %1472 = vmatprep.mubr.bf16.mxu0 0
        %1473 = vmatmul.mubr.bf16.gmra.mrb[0].mxu0 %v1302
        %v1474 = vpop.f32.mrb[0].mxu0
        %v1475 = vadd.f32 0.0, %v1474
        %v1476 = vpop.f32.mrb[0].mxu0
        %v1477 = vpop.f32.mrb[0].mxu0
        %v1478 = vadd.f32 0.0, %v1477
        %v1479 = vpop.f32.mrb[0].mxu0
        %1480 = vmatprep.mubr.bf16.mxu0 0
        %1481 = vmatmul.mubr.bf16.gmra.mrb[0].mxu0 %v1305
        %v1482 = vpop.f32.mrb[0].mxu0
        %v1483 = vadd.f32 0.0, %v1482
        %v1484 = vpop.f32.mrb[0].mxu0
        %v1485 = vpop.f32.mrb[0].mxu0
        %v1486 = vadd.f32 0.0, %v1485
        %v1487 = vpop.f32.mrb[0].mxu0
        %1488 = vmatprep.mubr.bf16.mxu0 0
        %1489 = vmatmul.mubr.bf16.gmra.mrb[0].mxu0 %v1308
        %v1490 = vpop.f32.mrb[0].mxu0
        %v1491 = vadd.f32 0.0, %v1490
        %v1492 = vpop.f32.mrb[0].mxu0
        %v1493 = vpop.f32.mrb[0].mxu0
        %v1494 = vadd.f32 0.0, %v1493
        %v1495 = vpop.f32.mrb[0].mxu0
        %1496 = vmatprep.mubr.bf16.mxu0 0
        %1497 = vmatmul.mubr.bf16.gmra.mrb[0].mxu0 %v1311
        %v1498 = vpop.f32.mrb[0].mxu0
        %v1499 = vadd.f32 0.0, %v1498
        %v1500 = vpop.f32.mrb[0].mxu0
        %v1501 = vpop.f32.mrb[0].mxu0
        %v1502 = vadd.f32 0.0, %v1501
        %v1503 = vpop.f32.mrb[0].mxu0
        %1504 = vmatprep.mubr.bf16.mxu0 0
        %1505 = vmatmul.mubr.bf16.gmra.mrb[0].mxu0 %v1314
        %v1506 = vpop.f32.mrb[0].mxu0
        %v1507 = vadd.f32 0.0, %v1506
        %v1508 = vpop.f32.mrb[0].mxu0
        %v1509 = vpop.f32.mrb[0].mxu0
        %v1510 = vadd.f32 0.0, %v1509
        %v1511 = vpop.f32.mrb[0].mxu0
        %1512 = vmatprep.mubr.bf16.mxu0 0
        %1513 = vmatmul.mubr.bf16.gmra.mrb[0].mxu0 %v1317
        %v1514 = vpop.f32.mrb[0].mxu0
        %v1515 = vadd.f32 0.0, %v1514
        %v1516 = vpop.f32.mrb[0].mxu0
        %v1517 = vpop.f32.mrb[0].mxu0
        %v1518 = vadd.f32 0.0, %v1517
        %v1519 = vpop.f32.mrb[0].mxu0
        %1520 = vmatprep.mubr.bf16.mxu0 0
        %1521 = vmatmul.mubr.bf16.gmra.mrb[0].mxu0 %v1320
        %v1522 = vpop.f32.mrb[0].mxu0
        %v1523 = vadd.f32 0.0, %v1522
        %v1524 = vpop.f32.mrb[0].mxu0
        %v1525 = vpop.f32.mrb[0].mxu0
        %v1526 = vpop.f32.mrb[0].mxu0
        %1527 = vdwg.mxu0
        %v1541 = vrot.slane %v1475, 1
        %v1542 = vrot.slane %v1478, 1
        %v1543 = vsel %vm501, %v1541, %v1542
        %v1544 = vrot.slane %v1483, 1
        %v1545 = vsel %vm501, %v1542, %v1544
        %v1546 = vrot.slane %v1486, 1
        %v1547 = vsel %vm501, %v1544, %v1546
        %v1548 = vrot.slane %v1491, 1
        %v1549 = vsel %vm501, %v1546, %v1548
        %v1550 = vrot.slane %v1494, 1
        %v1551 = vsel %vm501, %v1548, %v1550
        %v1552 = vrot.slane %v1499, 1
        %v1553 = vsel %vm501, %v1550, %v1552
        %v1554 = vrot.slane %v1502, 1
        %v1555 = vsel %vm501, %v1552, %v1554
        %v1556 = vrot.slane %v1507, 1
        %v1557 = vsel %vm501, %v1554, %v1556
        %v1558 = vrot.slane %v1510, 1
        %v1559 = vsel %vm501, %v1556, %v1558
        %v1560 = vrot.slane %v1515, 1
        %v1561 = vsel %vm501, %v1558, %v1560
        %v1562 = vrot.slane %v1518, 1
        %v1563 = vsel %vm501, %v1560, %v1562
        %v1564 = vrot.slane %v1523, 1
        %v1565 = vsel %vm501, %v1562, %v1564
        %v1578 = vadd.f32 %v1412, %v1543
        %v1579 = vadd.f32 %v1413, %v1545
        %v1580 = vadd.f32 %v1414, %v1547
        %v1581 = vadd.f32 %v1415, %v1549
        %v1582 = vadd.f32 %v1416, %v1551
        %v1583 = vadd.f32 %v1417, %v1553
        %v1584 = vadd.f32 %v1418, %v1555
        %v1585 = vadd.f32 %v1419, %v1557
        %v1586 = vadd.f32 %v1420, %v1559
        %v1587 = vadd.f32 %v1421, %v1561
        %v1588 = vadd.f32 %v1422, %v1563
        %v1589 = vadd.f32 %v1423, %v1565
        %s1590 = scalar_lea.vmem %s190, 96
        %v1591 = vld [vmem:[%s1590] sm:$0xf]
        %v1592 = vld [vmem:[%s1590 + $0x4] sm:$0xf]
        %v1593 = vld [vmem:[%s1590 + $0x8] sm:$0xf]
        %v1597 = vunpack.c.l.b16 %v1591
        %v1598 = vunpack.c.l.b16 %v1592
        %v1599 = vunpack.c.l.b16 %v1593
        %v1600 = vpack.c.b16 %v1598, %v1597
        %v1601 = vpack.c.b16 %v1599, %v1599
        %v1604 = vsel %vm281, %v1601, 0
        %1606 = vmatprep.subr.bf16.mxu0 0
        %1607 = vmatpush1.bf16.msra.mxu0 %v1600
        %1608 = vmatprep.subr.bf16.mxu0 0
        %1609 = vmatpush1.bf16.msra.mxu0 %v1604
        %1610 = vmatprep.subr.bf16.mxu0 0
        %1611 = vmatpush1.bf16.msra.mxu0 0
        %1612 = vmatprep.subr.bf16.mxu0 0
        %1613 = vmatpush1.bf16.msra.mxu0 0
        %1614 = vmatprep.subr.bf16.mxu0 0
        %1615 = vmatpush1.bf16.msra.mxu0 0
        %1616 = vmatprep.subr.bf16.mxu0 0
        %1617 = vmatpush1.bf16.msra.mxu0 0
        %1618 = vmatprep.subr.bf16.mxu0 0
        %1619 = vmatpush1.bf16.msra.mxu0 0
        %1620 = vmatprep.subr.bf16.mxu0 0
        %1621 = vmatpush1.bf16.msra.mxu0 0
        %1622 = vmatprep.subr.bf16.mxu0 0
        %1623 = vmatpush1.bf16.msra.mxu0 0
        %1624 = vmatprep.subr.bf16.mxu0 0
        %1625 = vmatpush1.bf16.msra.mxu0 0
        %1626 = vmatprep.subr.bf16.mxu0 0
        %1627 = vmatpush1.bf16.msra.mxu0 0
        %1628 = vmatprep.subr.bf16.mxu0 0
        %1629 = vmatpush1.bf16.msra.mxu0 0
        %1630 = vmatprep.subr.bf16.mxu0 0
        %1631 = vmatpush1.bf16.msra.mxu0 0
        %1632 = vmatprep.subr.bf16.mxu0 0
        %1633 = vmatpush1.bf16.msra.mxu0 0
        %1634 = vmatprep.subr.bf16.mxu0 0
        %1635 = vmatpush1.bf16.msra.mxu0 0
        %1636 = vmatprep.subr.bf16.mxu0 0
        %1637 = vmatpush1.bf16.msra.mxu0 0
        %1638 = vmatprep.mubr.bf16.mxu0 0
        %1639 = vmatmul.mubr.bf16.gmra.mrb[0].mxu0 %v1302
        %v1640 = vpop.f32.mrb[0].mxu0
        %v1641 = vadd.f32 0.0, %v1640
        %v1642 = vpop.f32.mrb[0].mxu0
        %v1643 = vpop.f32.mrb[0].mxu0
        %v1644 = vadd.f32 0.0, %v1643
        %v1645 = vpop.f32.mrb[0].mxu0
        %1646 = vmatprep.mubr.bf16.mxu0 0
        %1647 = vmatmul.mubr.bf16.gmra.mrb[0].mxu0 %v1305
        %v1648 = vpop.f32.mrb[0].mxu0
        %v1649 = vadd.f32 0.0, %v1648
        %v1650 = vpop.f32.mrb[0].mxu0
        %v1651 = vpop.f32.mrb[0].mxu0
        %v1652 = vadd.f32 0.0, %v1651
        %v1653 = vpop.f32.mrb[0].mxu0
        %1654 = vmatprep.mubr.bf16.mxu0 0
        %1655 = vmatmul.mubr.bf16.gmra.mrb[0].mxu0 %v1308
        %v1656 = vpop.f32.mrb[0].mxu0
        %v1657 = vadd.f32 0.0, %v1656
        %v1658 = vpop.f32.mrb[0].mxu0
        %v1659 = vpop.f32.mrb[0].mxu0
        %v1660 = vadd.f32 0.0, %v1659
        %v1661 = vpop.f32.mrb[0].mxu0
        %1662 = vmatprep.mubr.bf16.mxu0 0
        %1663 = vmatmul.mubr.bf16.gmra.mrb[0].mxu0 %v1311
        %v1664 = vpop.f32.mrb[0].mxu0
        %v1665 = vadd.f32 0.0, %v1664
        %v1666 = vpop.f32.mrb[0].mxu0
        %v1667 = vpop.f32.mrb[0].mxu0
        %v1668 = vadd.f32 0.0, %v1667
        %v1669 = vpop.f32.mrb[0].mxu0
        %1670 = vmatprep.mubr.bf16.mxu0 0
        %1671 = vmatmul.mubr.bf16.gmra.mrb[0].mxu0 %v1314
        %v1672 = vpop.f32.mrb[0].mxu0
        %v1673 = vadd.f32 0.0, %v1672
        %v1674 = vpop.f32.mrb[0].mxu0
        %v1675 = vpop.f32.mrb[0].mxu0
        %v1676 = vadd.f32 0.0, %v1675
        %v1677 = vpop.f32.mrb[0].mxu0
        %1678 = vmatprep.mubr.bf16.mxu0 0
        %1679 = vmatmul.mubr.bf16.gmra.mrb[0].mxu0 %v1317
        %v1680 = vpop.f32.mrb[0].mxu0
        %v1681 = vadd.f32 0.0, %v1680
        %v1682 = vpop.f32.mrb[0].mxu0
        %v1683 = vpop.f32.mrb[0].mxu0
        %v1684 = vadd.f32 0.0, %v1683
        %v1685 = vpop.f32.mrb[0].mxu0
        %1686 = vmatprep.mubr.bf16.mxu0 0
        %1687 = vmatmul.mubr.bf16.gmra.mrb[0].mxu0 %v1320
        %v1688 = vpop.f32.mrb[0].mxu0
        %v1689 = vadd.f32 0.0, %v1688
        %v1690 = vpop.f32.mrb[0].mxu0
        %v1691 = vpop.f32.mrb[0].mxu0
        %v1692 = vpop.f32.mrb[0].mxu0
        %1693 = vdwg.mxu0
        %v1707 = vrot.slane %v1641, 2
        %v1708 = vrot.slane %v1644, 2
        %v1709 = vsel %vm668, %v1707, %v1708
        %v1710 = vrot.slane %v1649, 2
        %v1711 = vsel %vm668, %v1708, %v1710
        %v1712 = vrot.slane %v1652, 2
        %v1713 = vsel %vm668, %v1710, %v1712
        %v1714 = vrot.slane %v1657, 2
        %v1715 = vsel %vm668, %v1712, %v1714
        %v1716 = vrot.slane %v1660, 2
        %v1717 = vsel %vm668, %v1714, %v1716
        %v1718 = vrot.slane %v1665, 2
        %v1719 = vsel %vm668, %v1716, %v1718
        %v1720 = vrot.slane %v1668, 2
        %v1721 = vsel %vm668, %v1718, %v1720
        %v1722 = vrot.slane %v1673, 2
        %v1723 = vsel %vm668, %v1720, %v1722
        %v1724 = vrot.slane %v1676, 2
        %v1725 = vsel %vm668, %v1722, %v1724
        %v1726 = vrot.slane %v1681, 2
        %v1727 = vsel %vm668, %v1724, %v1726
        %v1728 = vrot.slane %v1684, 2
        %v1729 = vsel %vm668, %v1726, %v1728
        %v1730 = vrot.slane %v1689, 2
        %v1731 = vsel %vm668, %v1728, %v1730
        %v1744 = vadd.f32 %v1578, %v1709
        %v1745 = vadd.f32 %v1579, %v1711
        %v1746 = vadd.f32 %v1580, %v1713
        %v1747 = vadd.f32 %v1581, %v1715
        %v1748 = vadd.f32 %v1582, %v1717
        %v1749 = vadd.f32 %v1583, %v1719
        %v1750 = vadd.f32 %v1584, %v1721
        %v1751 = vadd.f32 %v1585, %v1723
        %v1752 = vadd.f32 %v1586, %v1725
        %v1753 = vadd.f32 %v1587, %v1727
        %v1754 = vadd.f32 %v1588, %v1729
        %v1755 = vadd.f32 %v1589, %v1731
        %v1756 = vld [vmem:[%s193] sm:$0x1]
        %v1758 = vlaneseq
        %v1759 = vshrl.u32 %v1758, 7
        %v1760 = vsub.s32 0, %v1759
        %v1761 = vrot.slane %v1756, %v1760
        %v1763 = vadd.f32 %v1744, %v1761
        %v1764 = vadd.f32 %v1745, %v1761
        %v1765 = vadd.f32 %v1746, %v1761
        %v1766 = vadd.f32 %v1747, %v1761
        %v1767 = vadd.f32 %v1748, %v1761
        %v1768 = vadd.f32 %v1749, %v1761
        %v1769 = vadd.f32 %v1750, %v1761
        %v1770 = vadd.f32 %v1751, %v1761
        %v1771 = vadd.f32 %v1752, %v1761
        %v1772 = vadd.f32 %v1753, %v1761
        %v1773 = vadd.f32 %v1754, %v1761
        %v1774 = vadd.f32 %v1755, %v1761
        %v1775 = vpack.c.bf16 %v1764, %v1763
        %v1776 = vpack.c.bf16 %v1766, %v1765
        %v1777 = vpack.c.bf16 %v1768, %v1767
        %v1778 = vpack.c.bf16 %v1770, %v1769
        %v1779 = vpack.c.bf16 %v1772, %v1771
        %v1780 = vpack.c.bf16 %v1774, %v1773
        %v1787 = vunpack.c.l.b16 %v1775
        %v1788 = vunpack.c.h.b16 %v1775
        %v1789 = vunpack.c.l.b16 %v1776
        %v1790 = vunpack.c.h.b16 %v1776
        %v1791 = vunpack.c.l.b16 %v1777
        %v1792 = vunpack.c.h.b16 %v1777
        %v1793 = vunpack.c.l.b16 %v1778
        %v1794 = vunpack.c.h.b16 %v1778
        %v1795 = vunpack.c.l.b16 %v1779
        %v1796 = vunpack.c.h.b16 %v1779
        %v1797 = vunpack.c.l.b16 %v1780
        %v1798 = vunpack.c.h.b16 %v1780
        %v1799 = vpack.c.b16 %v1787, %v1787
        %v1800 = vpack.c.b16 %v1788, %v1788
        %v1801 = vpack.c.b16 %v1789, %v1789
        %v1802 = vpack.c.b16 %v1790, %v1790
        %v1803 = vpack.c.b16 %v1791, %v1791
        %v1804 = vpack.c.b16 %v1792, %v1792
        %v1805 = vpack.c.b16 %v1793, %v1793
        %v1806 = vpack.c.b16 %v1794, %v1794
        %v1807 = vpack.c.b16 %v1795, %v1795
        %v1808 = vpack.c.b16 %v1796, %v1796
        %v1809 = vpack.c.b16 %v1797, %v1797
        %v1810 = vpack.c.b16 %v1798, %v1798
        %1823 = vst [vmem:[%s186] sm:$0xf] %v1799
        %1824 = vst [vmem:[%s186 + $0x4] sm:$0xf] %v1800
        %1825 = vst [vmem:[%s186 + $0x8] sm:$0xf] %v1801
        %1826 = vst [vmem:[%s186 + $0xc] sm:$0xf] %v1802
        %1827 = vst [vmem:[%s186 + $0x10] sm:$0xf] %v1803
        %1828 = vst [vmem:[%s186 + $0x14] sm:$0xf] %v1804
        %1829 = vst [vmem:[%s186 + $0x18] sm:$0xf] %v1805
        %1830 = vst [vmem:[%s186 + $0x1c] sm:$0xf] %v1806
        %1831 = vst [vmem:[%s186 + $0x20] sm:$0xf] %v1807
        %1832 = vst [vmem:[%s186 + $0x24] sm:$0xf] %v1808
        %1833 = vst [vmem:[%s186 + $0x28] sm:$0xf] %v1809
        %1834 = vst [vmem:[%s186 + $0x2c] sm:$0xf] %v1810
        %s1835 = sand.u32 %s112, 1
        %s1836 = scalar_lea.sflag [#allocation3], %s1835
        %s1837 = sand.u32 %s112, 1
        %s1838 = smul.addr %s1837, 48
        %s1839 = scalar_lea.vmem [#allocation2], %s1838
        // Predicated region
        $region33: #{tpu_custom_call.1} parent=31 // pred_check
          %p1840 = pneg %p122
        $region34: #{tpu_custom_call.1} parent=31 // pred_check_branch
          %1842 = sbr.rel (%p1840) target = $region36
        $region35: #{tpu_custom_call.1} parent=31 // pred_region
          %s1843 = smul.u32 12, %s21
          %s1845 = ssub.s32 768, 768
          %1846 = vsyncadd %s1836, %s1845
          %s1847 = sadd.s32 %s22, %s1843
          %s1848 = smul.addr %s1847, 64
          %s1849 = scalar_lea.hbm %s3, %s1848
          %s1850 = sshll.u32 %s1839, 4
          %s1851 = int_to_ptr.vmem [resolvable:$true] %s1850
          %1856 = dma.vmem_to_hbm [thread:$0]  %s1851, 768, %s1849, %s1836, 64, 64, 4
        $region36: #{tpu_custom_call.1} parent=31 // pred_fallthru
          _
      $region32: #{tpu_custom_call.1} parent=5 // pred_fallthru
        _
      %p1857 = scmp.le.s32.totalorder 2, %s12
      // Predicated region
      $region37: #{tpu_custom_call.1} parent=5 // pred_check
        %p1858 = pneg %p1857
      $region38: #{tpu_custom_call.1} parent=5 // pred_check_branch
        %1860 = sbr.rel (%p1858) target = $region40
      $region39: #{tpu_custom_call.1} parent=5 // pred_region
        %s1861 = ssub.s32 %s12, 2
        // Predicated region
        $region41: #{tpu_custom_call.1} parent=39 // pred_check
          %p1862 = pneg %p128
        $region42: #{tpu_custom_call.1} parent=39 // pred_check_branch
          %1864 = sbr.rel (%p1862) target = $region44
        $region43: #{tpu_custom_call.1} parent=39 // pred_region
          %s1865 = sand.u32 %s113, 1
          %s1866 = scalar_lea.sflag [#allocation3], %s1865
          %s1867 = sand.u32 %s113, 1
          %s1868 = smul.addr %s1867, 48
          %s1869 = scalar_lea.vmem [#allocation2], %s1868
          %1870 = dma.done %s1866, 768
        $region44: #{tpu_custom_call.1} parent=39 // pred_fallthru
          _
      $region40: #{tpu_custom_call.1} parent=5 // pred_fallthru
        _
    $region6: #{tpu_custom_call.1} parent=1 // loop_footer
      %s16 = sadd.s32 1, %s12
    $region7: #{tpu_custom_call.1} parent=1 // loop_footer_branch
      %11 = sbr.rel target = $region3
    $region8: #{tpu_custom_call.1} parent=1 // loop_exit
      _
    %1871 = vsyncpa [#allocation3], 1
    %s1872 = scalar_lea.sflag [#allocation3], 1
    %1873 = vsyncpa %s1872, 1

</llo_original>
